<compile_context>
chip_gen: v7x
topology: tpu7x:2x2x1
jax: 0.10.0
libtpu: 0.0.40
codegen_flags: <defaults>
</compile_context>

<pallas_src>
import functools

import jax
import jax.numpy as jnp
from jax.experimental import pallas as pl
from jax.experimental.pallas import tpu as pltpu

NEG_SLOPE = 0.01                          # F.leaky_relu default negative_slope
LANE = 128
A_TILE_MAX_ELEMS = 4 * 1024 * 1024        # A tile <= 8 MiB bf16 (16 MiB double-buffered)
XW_RESIDENT_MAX_BYTES = 8 * 1024 * 1024   # keep XW VMEM-resident up to 8 MiB


def _round_up(x, m):
    return (x + m - 1) // m * m


def _vmem_limit():
    # Per-generation cap with headroom below physical VMEM (v5e/v6e: 128 MiB, v7x: 64 MiB).
    try:
        cap = getattr(pltpu.get_tpu_info(), "vmem_capacity_bytes", 64 << 20)
    except Exception:
        cap = 64 << 20
    return max(32 << 20, min(int(cap) * 3 // 4, 96 << 20))


def _pick_row_tile(n_pad):
    for t in (1024, 512, 256, 128):
        if n_pad % t == 0:
            return t
    return 128


def _pick_reduction_tile(n_pad, tm):
    # Reduction tile decoupled from tm; as large as the A-tile VMEM budget allows.
    for t in (4096, 2048, 1024, 512, 256, 128):
        if n_pad % t == 0 and tm * t <= A_TILE_MAX_ELEMS:
            return t
    return 128


def _pick_xw_row_tile(n_pad):
    # dense_xw is step-overhead-bound at small tiles; use a much larger row tile.
    for t in (4096, 2048, 1024, 512, 256, 128):
        if n_pad % t == 0:
            return t
    return 128


# ---------------------------------------------------------------------------
# Kernel 1 (layer-1 only): XW = H @ W   (row-tiled, W resident)
# ---------------------------------------------------------------------------
def _xw_kernel(h_ref, w_ref, o_ref):
    o_ref[...] = jnp.dot(
        h_ref[...], w_ref[...], preferred_element_type=jnp.float32
    ).astype(o_ref.dtype)


def dense_xw(h_bf16, w_bf16, *, tm, vmem_limit):
    n_pad, f_in = h_bf16.shape
    f_out = w_bf16.shape[1]
    return pl.pallas_call(
        _xw_kernel,
        out_shape=jax.ShapeDtypeStruct((n_pad, f_out), jnp.bfloat16),
        grid_spec=pltpu.PrefetchScalarGridSpec(
            num_scalar_prefetch=0,
            grid=(n_pad // tm,),
            in_specs=[
                pl.BlockSpec((tm, f_in), lambda i: (i, 0)),
                pl.BlockSpec((f_in, f_out), lambda i: (0, 0)),
            ],
            out_specs=pl.BlockSpec((tm, f_out), lambda i: (i, 0)),
        ),
        compiler_params=pltpu.CompilerParams(
            dimension_semantics=("parallel",),
            vmem_limit_bytes=vmem_limit,
        ),
    )(h_bf16, w_bf16)


# ---------------------------------------------------------------------------
# Kernel 2: fused aggregate
#   XW_next = ( leaky_relu(A_hat @ XW + b) )_bf16 @ W_next    (layers 1..L-1)
#   OUT     =              A_hat @ XW + b                      (final layer)
# A_hat streamed in (tm, tk) bf16 tiles; XW VMEM-resident (or streamed fallback);
# f32 VMEM accumulator; output BlockSpec constant over the reduction axis.
# ---------------------------------------------------------------------------
def _accumulate(a_ref, xw_ref, acc_ref, resident_tk):
    k = pl.program_id(1)

    @pl.when(k == 0)
    def _():
        acc_ref[...] = jnp.zeros_like(acc_ref)

    if resident_tk is None:
        xw_blk = xw_ref[...]                       # streamed (tk, f) slice
    else:
        start = pl.multiple_of(k * resident_tk, resident_tk)
        xw_blk = xw_ref[pl.ds(start, resident_tk), :]   # slice of resident XW

    acc_ref[...] += jnp.dot(a_ref[...], xw_blk, preferred_element_type=jnp.float32)


def _agg_fused_kernel(a_ref, xw_ref, b_ref, w_next_ref, o_ref, acc_ref, *,
                      apply_act, resident_tk):
    _accumulate(a_ref, xw_ref, acc_ref, resident_tk)

    @pl.when(pl.program_id(1) == pl.num_programs(1) - 1)
    def _():
        z = acc_ref[...] + b_ref[...]
        if apply_act:
            z = jnp.where(z >= 0, z, NEG_SLOPE * z)
        # Fused next-layer feature transform: XW_{l+1} = H_l @ W_{l+1}
        o_ref[...] = jnp.dot(
            z.astype(jnp.bfloat16), w_next_ref[...],
            preferred_element_type=jnp.float32,
        ).astype(o_ref.dtype)


def _agg_final_kernel(a_ref, xw_ref, b_ref, o_ref, acc_ref, *,
                      apply_act, resident_tk):
    _accumulate(a_ref, xw_ref, acc_ref, resident_tk)

    @pl.when(pl.program_id(1) == pl.num_programs(1) - 1)
    def _():
        z = acc_ref[...] + b_ref[...]
        if apply_act:
            z = jnp.where(z >= 0, z, NEG_SLOPE * z)
        o_ref[...] = z.astype(o_ref.dtype)


def aggregate(a_bf16, xw_bf16, b_f32, w_next, *, tm, tk, apply_act, out_dtype,
              vmem_limit):
    n_pad = a_bf16.shape[0]
    f_cur = xw_bf16.shape[1]

    xw_resident = (n_pad * f_cur * 2) <= XW_RESIDENT_MAX_BYTES
    if xw_resident:
        xw_spec = pl.BlockSpec((n_pad, f_cur), lambda i, k: (0, 0))   # fetched once
        resident_tk = tk
    else:
        xw_spec = pl.BlockSpec((tk, f_cur), lambda i, k: (k, 0))      # streamed fallback
        resident_tk = None

    in_specs = [
        pl.BlockSpec((tm, tk), lambda i, k: (i, k)),    # A_hat tile (dominant HBM stream)
        xw_spec,
        pl.BlockSpec((1, f_cur), lambda i, k: (0, 0)),  # bias row
    ]
    args = [a_bf16, xw_bf16, b_f32]

    if w_next is not None:
        in_specs.append(pl.BlockSpec(w_next.shape, lambda i, k: (0, 0)))  # resident W_{l+1}
        args.append(w_next)
        kernel = functools.partial(_agg_fused_kernel, apply_act=apply_act,
                                   resident_tk=resident_tk)
        f_out = w_next.shape[1]
    else:
        kernel = functools.partial(_agg_final_kernel, apply_act=apply_act,
                                   resident_tk=resident_tk)
        f_out = f_cur

    return pl.pallas_call(
        kernel,
        out_shape=jax.ShapeDtypeStruct((n_pad, f_out), out_dtype),
        grid_spec=pltpu.PrefetchScalarGridSpec(
            num_scalar_prefetch=0,
            grid=(n_pad // tm, n_pad // tk),
            in_specs=in_specs,
            out_specs=pl.BlockSpec((tm, f_out), lambda i, k: (i, 0)),  # resident across k
            scratch_shapes=[pltpu.VMEM((tm, f_cur), jnp.float32)],
        ),
        compiler_params=pltpu.CompilerParams(
            dimension_semantics=("parallel", "arbitrary"),
            vmem_limit_bytes=vmem_limit,
        ),
    )(*args)


# ---------------------------------------------------------------------------
# Padding / casting (hoisted out of the forward so it is done once) + forward
# ---------------------------------------------------------------------------
def prepare_gcn_inputs(a_hat, x, params):
    """Pad to LANE multiples + cast the heavy streams to bf16. Cache the result
    across forward calls instead of re-materializing it every step."""
    n = x.shape[0]
    n_pad = _round_up(max(n, LANE), LANE)
    a_p = jnp.zeros((n_pad, n_pad), jnp.bfloat16).at[:n, :n].set(
        a_hat.astype(jnp.bfloat16))
    f_in0_p = _round_up(x.shape[1], LANE)
    h_p = jnp.zeros((n_pad, f_in0_p), jnp.bfloat16).at[:n, :x.shape[1]].set(
        x.astype(jnp.bfloat16))

    padded_params = []
    for w, b in params:
        f_in, f_out = w.shape
        f_in_p = _round_up(f_in, LANE)
        f_out_p = _round_up(f_out, LANE)
        w_p = jnp.zeros((f_in_p, f_out_p), jnp.bfloat16).at[:f_in, :f_out].set(
            w.astype(jnp.bfloat16))
        b_p = jnp.zeros((1, f_out_p), jnp.float32).at[0, :f_out].set(
            b.astype(jnp.float32).reshape(-1))
        padded_params.append((w_p, b_p))
    return a_p, h_p, padded_params, n


def gcn3_forward_padded(a_p, h_p, padded_params):
    """3-layer GCN on pre-padded inputs. Returns padded (n_pad, f_out_p) f32 logits."""
    n_pad = a_p.shape[0]
    vmem_limit = _vmem_limit()
    tm = _pick_row_tile(n_pad)
    tk = _pick_reduction_tile(n_pad, tm)
    tm_xw = _pick_xw_row_tile(n_pad)

    # Layer-1 feature transform; later layers' H@W are fused into the previous
    # layer's aggregate finalize, so H1/H2 never hit HBM.
    xw = dense_xw(h_p, padded_params[0][0], tm=tm_xw, vmem_limit=vmem_limit)

    n_layers = len(padded_params)
    for li in range(n_layers):
        _, b_p = padded_params[li]
        last = li == n_layers - 1
        w_next = None if last else padded_params[li + 1][0]
        xw = aggregate(
            a_p, xw, b_p, w_next,
            tm=tm, tk=tk,
            apply_act=not last,
            out_dtype=jnp.float32 if last else jnp.bfloat16,
            vmem_limit=vmem_limit,
        )
    return xw


def gcn3_forward(a_hat, x, params):
    a_p, h_p, padded_params, n = prepare_gcn_inputs(a_hat, x, params)
    num_classes = params[-1][0].shape[1]
    out = gcn3_forward_padded(a_p, h_p, padded_params)
    return out[:n, :num_classes]


# ---------------------------------------------------------------------------
# Graph / parameter construction + pure-JAX reference (mirrors the bf16 casts)
# ---------------------------------------------------------------------------
def build_normalized_adjacency(edge_index, num_nodes):
    """Dense D^-1/2 (A + I) D^-1/2, replicating PyG gcn_norm (add_self_loops=True)."""
    src = edge_index[0]
    dst = edge_index[1]
    a = jnp.zeros((num_nodes, num_nodes), jnp.float32)
    a = a.at[dst, src].add(1.0)
    a = a + jnp.eye(num_nodes, dtype=jnp.float32)
    deg = a.sum(axis=1)
    dinv = jnp.where(deg > 0, jax.lax.rsqrt(deg), 0.0)
    return dinv[:, None] * a * dinv[None, :]


def glorot(key, fan_in, fan_out):
    limit = jnp.sqrt(6.0 / (fan_in + fan_out))
    return jax.random.uniform(key, (fan_in, fan_out), jnp.float32, -limit, limit)


def reference_forward(a_hat, x, params):
    def bf(v):
        return v.astype(jnp.bfloat16).astype(jnp.float32)

    a = bf(a_hat)
    h = bf(x)
    (w1, b1), (w2, b2), (w3, b3) = params

    # Layer-1 H@W (bf16 inputs, f32 acc, bf16 stored)
    xw = bf(jnp.dot(h, bf(w1)))
    # Fused aggregate layers: z = leaky(A @ XW + b); XW_next = bf16(z) @ W_next (bf16 stored)
    for b, w_next in ((b1, w2), (b2, w3)):
        z = jnp.dot(a, xw) + b.reshape(1, -1)
        z = jnp.where(z >= 0, z, NEG_SLOPE * z)
        xw = bf(jnp.dot(bf(z), bf(w_next)))
    # Final aggregate, f32 output, no activation
    return jnp.dot(a, xw) + b3.reshape(1, -1)


if __name__ == "__main__":
    key = jax.random.PRNGKey(0)
    k_x, k_e, k_w1, k_w2, k_w3 = jax.random.split(key, 5)

    # Small synthetic graph: 32 nodes, 10 input features, hidden=64, 4 classes.
    num_nodes = 32
    in_feats = 10
    hidden = 64
    num_classes = 4
    num_edges = 64

    x = jax.random.normal(k_x, (num_nodes, in_feats), jnp.float32)

    # Random directed edges + flipped edges (as in the reference script).
    ei = jax.random.randint(k_e, (2, num_edges), 0, num_nodes, jnp.int32)
    edge_index = jnp.concatenate([ei, ei[::-1, :]], axis=1)
    a_hat = build_normalized_adjacency(edge_index, num_nodes)

    # Deterministic GCNConv-style init (glorot weights, zero bias).
    w1 = glorot(k_w1, in_feats, hidden)
    b1 = jnp.zeros((hidden,), jnp.float32)
    w2 = glorot(k_w2, hidden, hidden)
    b2 = jnp.zeros((hidden,), jnp.float32)
    w3 = glorot(k_w3, hidden, num_classes)
    b3 = jnp.zeros((num_classes,), jnp.float32)
    params = [(w1, b1), (w2, b2), (w3, b3)]

    # Padding / casting hoisted out of the forward; padded forward jitted + reused.
    a_p, h_p, padded_params, n = prepare_gcn_inputs(a_hat, x, params)
    fwd = jax.jit(gcn3_forward_padded)
    out_pad = jax.block_until_ready(fwd(a_p, h_p, padded_params))
    out = out_pad[:num_nodes, :num_classes]

    ref = reference_forward(a_hat, x, params)
    assert out.shape == (num_nodes, num_classes)
    assert jnp.allclose(out, ref, atol=1e-2, rtol=1e-2), "Pallas kernel mismatch vs reference"

    print("KERNEL_OK")
</pallas_src>

<mosaic_0001>
module attributes {stable_mosaic.version = 11 : i64} {
  func.func @_agg_final_kernel(%arg0: i32, %arg1: i32, %arg2: memref<128x128xbf16, #tpu.memory_space<vmem>>, %arg3: memref<128x128xbf16, #tpu.memory_space<vmem>>, %arg4: memref<1x128xf32, #tpu.memory_space<vmem>>, %arg5: memref<128x128xf32, #tpu.memory_space<vmem>>, %arg6: memref<128x128xf32, #tpu.memory_space<vmem>>) attributes {dimension_semantics = [#tpu.dimension_semantics<parallel>, #tpu.dimension_semantics<arbitrary>], iteration_bounds = array<i64: 1, 1>, scalar_prefetch = 0 : i64, scratch_operands = 1 : i64, tpu.core_type = #tpu.core_type<tc>, window_params = [{transform_indices = @transform_0, window_bounds = array<i64: 128, 128>}, {pipeline_mode = #tpu.pipeline_mode<synchronous>, transform_indices = @transform_1, window_bounds = array<i64: 128, 128>}, {pipeline_mode = #tpu.pipeline_mode<synchronous>, transform_indices = @transform_2, window_bounds = array<i64: 1, 128>}, {transform_indices = @transform_3, window_bounds = array<i64: 128, 128>}]} {
    %c0_i32 = arith.constant 0 : i32
    %0 = arith.cmpi eq, %arg1, %c0_i32 : i32
    %1 = arith.extui %0 : i1 to i32
    %c0_i32_0 = arith.constant 0 : i32
    %2 = arith.cmpi ne, %1, %c0_i32_0 : i32
    scf.if %2 {
      %cst_9 = arith.constant 0.000000e+00 : f32
      %15 = vector.broadcast %cst_9 : f32 to vector<128x128xf32>
      %c0_10 = arith.constant 0 : index
      %c0_11 = arith.constant 0 : index
      %16 = vector.load %arg6[%c0_10, %c0_11] : memref<128x128xf32, #tpu.memory_space<vmem>>, vector<128x128xf32>
      tpu.vector_store %arg6[%c0_10, %c0_11], %15 {strides = array<i32>} : memref<128x128xf32, #tpu.memory_space<vmem>>, vector<128x128xf32>,
    } else {
    }
    %c128_i32 = arith.constant 128 : i32
    %3 = arith.muli %arg1, %c128_i32 : i32
    %4 = tpu.assume_multiple %3, 128 : i32
    %5 = arith.index_cast %4 : i32 to index
    %c0 = arith.constant 0 : index
    %6 = vector.load %arg3[%5, %c0] : memref<128x128xbf16, #tpu.memory_space<vmem>>, vector<128x128xbf16>
    %c0_1 = arith.constant 0 : index
    %c0_2 = arith.constant 0 : index
    %7 = vector.load %arg6[%c0_1, %c0_2] : memref<128x128xf32, #tpu.memory_space<vmem>>, vector<128x128xf32>
    %c0_3 = arith.constant 0 : index
    %c0_4 = arith.constant 0 : index
    %8 = vector.load %arg2[%c0_3, %c0_4] : memref<128x128xbf16, #tpu.memory_space<vmem>>, vector<128x128xbf16>
    %cst = arith.constant dense<0.000000e+00> : vector<128x128xf32>
    %9 = tpu.matmul %8, %6, %cst {dimension_numbers = #tpu.dot_dimension_numbers<[1], [0], [0], [1], [0, 0, 1, 1], [], []>} : vector<128x128xbf16>, vector<128x128xbf16>, vector<128x128xf32> -> vector<128x128xf32>
    %10 = arith.addf %7, %9 : vector<128x128xf32>
    %c0_5 = arith.constant 0 : index
    %c0_6 = arith.constant 0 : index
    %11 = vector.load %arg6[%c0_5, %c0_6] : memref<128x128xf32, #tpu.memory_space<vmem>>, vector<128x128xf32>
    tpu.vector_store %arg6[%c0_5, %c0_6], %10 {strides = array<i32>} : memref<128x128xf32, #tpu.memory_space<vmem>>, vector<128x128xf32>,
    %c0_i32_7 = arith.constant 0 : i32
    %12 = arith.cmpi eq, %arg1, %c0_i32_7 : i32
    %13 = arith.extui %12 : i1 to i32
    %c0_i32_8 = arith.constant 0 : i32
    %14 = arith.cmpi ne, %13, %c0_i32_8 : i32
    scf.if %14 {
      %c0_9 = arith.constant 0 : index
      %c0_10 = arith.constant 0 : index
      %15 = vector.load %arg6[%c0_9, %c0_10] : memref<128x128xf32, #tpu.memory_space<vmem>>, vector<128x128xf32>
      %c0_11 = arith.constant 0 : index
      %c0_12 = arith.constant 0 : index
      %16 = vector.load %arg4[%c0_11, %c0_12] : memref<1x128xf32, #tpu.memory_space<vmem>>, vector<1x128xf32>
      %17 = vector.broadcast %16 : vector<1x128xf32> to vector<128x128xf32>
      %18 = arith.addf %15, %17 : vector<128x128xf32>
      %c0_13 = arith.constant 0 : index
      %c0_14 = arith.constant 0 : index
      %19 = vector.load %arg5[%c0_13, %c0_14] : memref<128x128xf32, #tpu.memory_space<vmem>>, vector<128x128xf32>
      tpu.vector_store %arg5[%c0_13, %c0_14], %18 {strides = array<i32>} : memref<128x128xf32, #tpu.memory_space<vmem>>, vector<128x128xf32>,
    } else {
    }
    return
  }
  func.func @transform_0(%arg0: i32, %arg1: i32) -> (i32, i32) {
    %c0_i32 = arith.constant 0 : i32
    return %arg0, %arg1 : i32, i32
  }
  func.func @transform_1(%arg0: i32, %arg1: i32) -> (i32, i32) {
    %c0_i32 = arith.constant 0 : i32
    %c0_i32_0 = arith.constant 0 : i32
    %c0_i32_1 = arith.constant 0 : i32
    return %c0_i32, %c0_i32_0 : i32, i32
  }
  func.func @transform_2(%arg0: i32, %arg1: i32) -> (i32, i32) {
    %c0_i32 = arith.constant 0 : i32
    %c0_i32_0 = arith.constant 0 : i32
    %c0_i32_1 = arith.constant 0 : i32
    return %c0_i32, %c0_i32_0 : i32, i32
  }
  func.func @transform_3(%arg0: i32, %arg1: i32) -> (i32, i32) {
    %c0_i32 = arith.constant 0 : i32
    %c0_i32_0 = arith.constant 0 : i32
    return %arg0, %c0_i32 : i32, i32
  }
}

module attributes {stable_mosaic.version = 11 : i64} {
  func.func @_xw_kernel(%arg0: i32, %arg1: memref<128x128xbf16, #tpu.memory_space<vmem>>, %arg2: memref<128x128xbf16, #tpu.memory_space<vmem>>, %arg3: memref<128x128xbf16, #tpu.memory_space<vmem>>) attributes {dimension_semantics = [#tpu.dimension_semantics<parallel>], iteration_bounds = array<i64: 1>, scalar_prefetch = 0 : i64, scratch_operands = 0 : i64, tpu.core_type = #tpu.core_type<tc>, window_params = [{transform_indices = @transform_0, window_bounds = array<i64: 128, 128>}, {pipeline_mode = #tpu.pipeline_mode<synchronous>, transform_indices = @transform_1, window_bounds = array<i64: 128, 128>}, {transform_indices = @transform_2, window_bounds = array<i64: 128, 128>}]} {
    %c0 = arith.constant 0 : index
    %c0_0 = arith.constant 0 : index
    %0 = vector.load %arg1[%c0, %c0_0] : memref<128x128xbf16, #tpu.memory_space<vmem>>, vector<128x128xbf16>
    %c0_1 = arith.constant 0 : index
    %c0_2 = arith.constant 0 : index
    %1 = vector.load %arg2[%c0_1, %c0_2] : memref<128x128xbf16, #tpu.memory_space<vmem>>, vector<128x128xbf16>
    %cst = arith.constant dense<0.000000e+00> : vector<128x128xf32>
    %2 = tpu.matmul %0, %1, %cst {dimension_numbers = #tpu.dot_dimension_numbers<[1], [0], [0], [1], [0, 0, 1, 1], [], []>} : vector<128x128xbf16>, vector<128x128xbf16>, vector<128x128xf32> -> vector<128x128xf32>
    %3 = arith.truncf %2 : vector<128x128xf32> to vector<128x128xbf16>
    %c0_3 = arith.constant 0 : index
    %c0_4 = arith.constant 0 : index
    %4 = vector.load %arg3[%c0_3, %c0_4] : memref<128x128xbf16, #tpu.memory_space<vmem>>, vector<128x128xbf16>
    tpu.vector_store %arg3[%c0_3, %c0_4], %3 {strides = array<i32>} : memref<128x128xbf16, #tpu.memory_space<vmem>>, vector<128x128xbf16>,
    return
  }
  func.func @transform_0(%arg0: i32) -> (i32, i32) {
    %c0_i32 = arith.constant 0 : i32
    %c0_i32_0 = arith.constant 0 : i32
    return %arg0, %c0_i32 : i32, i32
  }
  func.func @transform_1(%arg0: i32) -> (i32, i32) {
    %c0_i32 = arith.constant 0 : i32
    %c0_i32_0 = arith.constant 0 : i32
    %c0_i32_1 = arith.constant 0 : i32
    return %c0_i32, %c0_i32_0 : i32, i32
  }
  func.func @transform_2(%arg0: i32) -> (i32, i32) {
    %c0_i32 = arith.constant 0 : i32
    %c0_i32_0 = arith.constant 0 : i32
    return %arg0, %c0_i32 : i32, i32
  }
}

module attributes {stable_mosaic.version = 11 : i64} {
  func.func @_agg_fused_kernel(%arg0: i32, %arg1: i32, %arg2: memref<128x128xbf16, #tpu.memory_space<vmem>>, %arg3: memref<128x128xbf16, #tpu.memory_space<vmem>>, %arg4: memref<1x128xf32, #tpu.memory_space<vmem>>, %arg5: memref<128x128xbf16, #tpu.memory_space<vmem>>, %arg6: memref<128x128xbf16, #tpu.memory_space<vmem>>, %arg7: memref<128x128xf32, #tpu.memory_space<vmem>>) attributes {dimension_semantics = [#tpu.dimension_semantics<parallel>, #tpu.dimension_semantics<arbitrary>], iteration_bounds = array<i64: 1, 1>, scalar_prefetch = 0 : i64, scratch_operands = 1 : i64, tpu.core_type = #tpu.core_type<tc>, window_params = [{transform_indices = @transform_0, window_bounds = array<i64: 128, 128>}, {pipeline_mode = #tpu.pipeline_mode<synchronous>, transform_indices = @transform_1, window_bounds = array<i64: 128, 128>}, {pipeline_mode = #tpu.pipeline_mode<synchronous>, transform_indices = @transform_2, window_bounds = array<i64: 1, 128>}, {pipeline_mode = #tpu.pipeline_mode<synchronous>, transform_indices = @transform_3, window_bounds = array<i64: 128, 128>}, {transform_indices = @transform_4, window_bounds = array<i64: 128, 128>}]} {
    %c0_i32 = arith.constant 0 : i32
    %0 = arith.cmpi eq, %arg1, %c0_i32 : i32
    %1 = arith.extui %0 : i1 to i32
    %c0_i32_0 = arith.constant 0 : i32
    %2 = arith.cmpi ne, %1, %c0_i32_0 : i32
    scf.if %2 {
      %cst_9 = arith.constant 0.000000e+00 : f32
      %15 = vector.broadcast %cst_9 : f32 to vector<128x128xf32>
      %c0_10 = arith.constant 0 : index
      %c0_11 = arith.constant 0 : index
      %16 = vector.load %arg7[%c0_10, %c0_11] : memref<128x128xf32, #tpu.memory_space<vmem>>, vector<128x128xf32>
      tpu.vector_store %arg7[%c0_10, %c0_11], %15 {strides = array<i32>} : memref<128x128xf32, #tpu.memory_space<vmem>>, vector<128x128xf32>,
    } else {
    }
    %c128_i32 = arith.constant 128 : i32
    %3 = arith.muli %arg1, %c128_i32 : i32
    %4 = tpu.assume_multiple %3, 128 : i32
    %5 = arith.index_cast %4 : i32 to index
    %c0 = arith.constant 0 : index
    %6 = vector.load %arg3[%5, %c0] : memref<128x128xbf16, #tpu.memory_space<vmem>>, vector<128x128xbf16>
    %c0_1 = arith.constant 0 : index
    %c0_2 = arith.constant 0 : index
    %7 = vector.load %arg7[%c0_1, %c0_2] : memref<128x128xf32, #tpu.memory_space<vmem>>, vector<128x128xf32>
    %c0_3 = arith.constant 0 : index
    %c0_4 = arith.constant 0 : index
    %8 = vector.load %arg2[%c0_3, %c0_4] : memref<128x128xbf16, #tpu.memory_space<vmem>>, vector<128x128xbf16>
    %cst = arith.constant dense<0.000000e+00> : vector<128x128xf32>
    %9 = tpu.matmul %8, %6, %cst {dimension_numbers = #tpu.dot_dimension_numbers<[1], [0], [0], [1], [0, 0, 1, 1], [], []>} : vector<128x128xbf16>, vector<128x128xbf16>, vector<128x128xf32> -> vector<128x128xf32>
    %10 = arith.addf %7, %9 : vector<128x128xf32>
    %c0_5 = arith.constant 0 : index
    %c0_6 = arith.constant 0 : index
    %11 = vector.load %arg7[%c0_5, %c0_6] : memref<128x128xf32, #tpu.memory_space<vmem>>, vector<128x128xf32>
    tpu.vector_store %arg7[%c0_5, %c0_6], %10 {strides = array<i32>} : memref<128x128xf32, #tpu.memory_space<vmem>>, vector<128x128xf32>,
    %c0_i32_7 = arith.constant 0 : i32
    %12 = arith.cmpi eq, %arg1, %c0_i32_7 : i32
    %13 = arith.extui %12 : i1 to i32
    %c0_i32_8 = arith.constant 0 : i32
    %14 = arith.cmpi ne, %13, %c0_i32_8 : i32
    scf.if %14 {
      %c0_9 = arith.constant 0 : index
      %c0_10 = arith.constant 0 : index
      %15 = vector.load %arg7[%c0_9, %c0_10] : memref<128x128xf32, #tpu.memory_space<vmem>>, vector<128x128xf32>
      %c0_11 = arith.constant 0 : index
      %c0_12 = arith.constant 0 : index
      %16 = vector.load %arg4[%c0_11, %c0_12] : memref<1x128xf32, #tpu.memory_space<vmem>>, vector<1x128xf32>
      %17 = vector.broadcast %16 : vector<1x128xf32> to vector<128x128xf32>
      %18 = arith.addf %15, %17 : vector<128x128xf32>
      %cst_13 = arith.constant 0.000000e+00 : f32
      %19 = vector.broadcast %cst_13 : f32 to vector<128x128xf32>
      %20 = arith.cmpf oge, %18, %19 : vector<128x128xf32>
      %cst_14 = arith.constant 0.00999999977 : f32
      %21 = vector.broadcast %cst_14 : f32 to vector<128x128xf32>
      %22 = arith.mulf %21, %18 : vector<128x128xf32>
      %23 = arith.select %20, %18, %22 : vector<128x128xi1>, vector<128x128xf32>
      %24 = arith.truncf %23 : vector<128x128xf32> to vector<128x128xbf16>
      %c0_15 = arith.constant 0 : index
      %c0_16 = arith.constant 0 : index
      %25 = vector.load %arg5[%c0_15, %c0_16] : memref<128x128xbf16, #tpu.memory_space<vmem>>, vector<128x128xbf16>
      %cst_17 = arith.constant dense<0.000000e+00> : vector<128x128xf32>
      %26 = tpu.matmul %24, %25, %cst_17 {dimension_numbers = #tpu.dot_dimension_numbers<[1], [0], [0], [1], [0, 0, 1, 1], [], []>} : vector<128x128xbf16>, vector<128x128xbf16>, vector<128x128xf32> -> vector<128x128xf32>
      %27 = arith.truncf %26 : vector<128x128xf32> to vector<128x128xbf16>
      %c0_18 = arith.constant 0 : index
      %c0_19 = arith.constant 0 : index
      %28 = vector.load %arg6[%c0_18, %c0_19] : memref<128x128xbf16, #tpu.memory_space<vmem>>, vector<128x128xbf16>
      tpu.vector_store %arg6[%c0_18, %c0_19], %27 {strides = array<i32>} : memref<128x128xbf16, #tpu.memory_space<vmem>>, vector<128x128xbf16>,
    } else {
    }
    return
  }
  func.func @transform_0(%arg0: i32, %arg1: i32) -> (i32, i32) {
    %c0_i32 = arith.constant 0 : i32
    return %arg0, %arg1 : i32, i32
  }
  func.func @transform_1(%arg0: i32, %arg1: i32) -> (i32, i32) {
    %c0_i32 = arith.constant 0 : i32
    %c0_i32_0 = arith.constant 0 : i32
    %c0_i32_1 = arith.constant 0 : i32
    return %c0_i32, %c0_i32_0 : i32, i32
  }
  func.func @transform_2(%arg0: i32, %arg1: i32) -> (i32, i32) {
    %c0_i32 = arith.constant 0 : i32
    %c0_i32_0 = arith.constant 0 : i32
    %c0_i32_1 = arith.constant 0 : i32
    return %c0_i32, %c0_i32_0 : i32, i32
  }
  func.func @transform_3(%arg0: i32, %arg1: i32) -> (i32, i32) {
    %c0_i32 = arith.constant 0 : i32
    %c0_i32_0 = arith.constant 0 : i32
    %c0_i32_1 = arith.constant 0 : i32
    return %c0_i32, %c0_i32_0 : i32, i32
  }
  func.func @transform_4(%arg0: i32, %arg1: i32) -> (i32, i32) {
    %c0_i32 = arith.constant 0 : i32
    %c0_i32_0 = arith.constant 0 : i32
    return %arg0, %c0_i32 : i32, i32
  }
}

</mosaic_0001>

<llo_original>
// kernel: gcn3_forward_padded.4
$region0: #{gcn3_forward_padded.4}
  #allocation0 [shape = 'u32[]', space=smem, size = 0x4, offset = 0x4, fixed_abs, tag = 'smem constant byte address 0x4 - core index']
  #allocation1 [shape = 'u32[144,128]{1,0:T(1,128)}', space=vmem, size = 0x12000, scoped, tag = 'internal scratch']
  %s0 = inlined_call_operand.hbm [shape: bf16[128,128], index: 0, kind: input, shape index: {}]
  %s1 = inlined_call_operand.hbm [shape: bf16[128,128], index: 1, kind: input, shape index: {}]
  %s2 = inlined_call_operand.vmem [shape: bf16[128,128], index: 2, kind: output, shape index: {}]
  %s3 = sld [smem:[#allocation0]]
  $region26: #{gcn3_forward_padded.4} parent=0
    _
  %s5 = ssub.s32 1, %s3
  %s6 = scalar_select 0, %s5, %s3
  $region1: #{gcn3_forward_padded.4} parent=0
    #allocation2 [shape = 'u8[32768]{0}', space=vmem, size = 0x8000, scoped, tag = 'input window, operand 0, single buffered']
    #allocation3 [shape = 's32[1]{0}', space=sflag, size = 0x4, scoped, tag = 'scoped memory for gcn3_forward_padded.4']
    #allocation4 [shape = 'u8[32768]{0}', space=vmem, size = 0x8000, scoped, tag = 'input window, operand 1, single buffered']
    #allocation5 [shape = 's32[1]{0}', space=sflag, size = 0x4, scoped, tag = 'scoped memory for gcn3_forward_padded.4']
    %7 = vsyncpa [#allocation3], 0
    %8 = vsyncpa [#allocation5], 0
    // Predicated region
    $region2: #{gcn3_forward_padded.4} parent=1 // pred_check
      _
    $region3: #{gcn3_forward_padded.4} parent=1 // pred_check_branch
      %10 = sbr.rel (0) target = $region5
    $region4: #{gcn3_forward_padded.4} parent=1 // pred_region
      %s12 = ssub.s32 1024, 1024
      %13 = vsyncadd [#allocation3], %s12
      %s14 = sshll.u32 [#allocation2], 4
      %s15 = int_to_ptr.vmem [resolvable:$true] %s14
      %20 = dma.hbm_to_vmem [thread:$0]  %s0, 1024, %s15, [#allocation3], 64, 64, 4
    $region5: #{gcn3_forward_padded.4} parent=1 // pred_fallthru
      _
    // Predicated region
    $region6: #{gcn3_forward_padded.4} parent=1 // pred_check
      _
    $region7: #{gcn3_forward_padded.4} parent=1 // pred_check_branch
      %22 = sbr.rel (0) target = $region9
    $region8: #{gcn3_forward_padded.4} parent=1 // pred_region
      %s24 = ssub.s32 1024, 1024
      %25 = vsyncadd [#allocation5], %s24
      %s26 = sshll.u32 [#allocation4], 4
      %s27 = int_to_ptr.vmem [resolvable:$true] %s26
      %32 = dma.hbm_to_vmem [thread:$0]  %s1, 1024, %s27, [#allocation5], 64, 64, 4
    $region9: #{gcn3_forward_padded.4} parent=1 // pred_fallthru
      _
    // Predicated region
    $region10: #{gcn3_forward_padded.4} parent=1 // pred_check
      _
    $region11: #{gcn3_forward_padded.4} parent=1 // pred_check_branch
      %34 = sbr.rel (0) target = $region13
    $region12: #{gcn3_forward_padded.4} parent=1 // pred_region
      %35 = dma.done [#allocation3], 1024
    $region13: #{gcn3_forward_padded.4} parent=1 // pred_fallthru
      _
    // Predicated region
    $region14: #{gcn3_forward_padded.4} parent=1 // pred_check
      _
    $region15: #{gcn3_forward_padded.4} parent=1 // pred_check_branch
      %37 = sbr.rel (0) target = $region17
    $region16: #{gcn3_forward_padded.4} parent=1 // pred_region
      %38 = dma.done [#allocation5], 1024
    $region17: #{gcn3_forward_padded.4} parent=1 // pred_fallthru
      _
    %v40 = vld [vmem:[#allocation2] sm:$0xf]
    %v41 = vld [vmem:[#allocation2 + $0x4] sm:$0xf]
    %v42 = vld [vmem:[#allocation2 + $0x8] sm:$0xf]
    %v43 = vld [vmem:[#allocation2 + $0xc] sm:$0xf]
    %v44 = vld [vmem:[#allocation2 + $0x10] sm:$0xf]
    %v45 = vld [vmem:[#allocation2 + $0x14] sm:$0xf]
    %v46 = vld [vmem:[#allocation2 + $0x18] sm:$0xf]
    %v47 = vld [vmem:[#allocation2 + $0x1c] sm:$0xf]
    %v48 = vld [vmem:[#allocation2 + $0x20] sm:$0xf]
    %v49 = vld [vmem:[#allocation2 + $0x24] sm:$0xf]
    %v50 = vld [vmem:[#allocation2 + $0x28] sm:$0xf]
    %v51 = vld [vmem:[#allocation2 + $0x2c] sm:$0xf]
    %v52 = vld [vmem:[#allocation2 + $0x30] sm:$0xf]
    %v53 = vld [vmem:[#allocation2 + $0x34] sm:$0xf]
    %v54 = vld [vmem:[#allocation2 + $0x38] sm:$0xf]
    %v55 = vld [vmem:[#allocation2 + $0x3c] sm:$0xf]
    %v56 = vld [vmem:[#allocation4] sm:$0xf]
    %v57 = vld [vmem:[#allocation4 + $0x4] sm:$0xf]
    %v58 = vld [vmem:[#allocation4 + $0x8] sm:$0xf]
    %v59 = vld [vmem:[#allocation4 + $0xc] sm:$0xf]
    %v60 = vld [vmem:[#allocation4 + $0x10] sm:$0xf]
    %v61 = vld [vmem:[#allocation4 + $0x14] sm:$0xf]
    %v62 = vld [vmem:[#allocation4 + $0x18] sm:$0xf]
    %v63 = vld [vmem:[#allocation4 + $0x1c] sm:$0xf]
    %v64 = vld [vmem:[#allocation4 + $0x20] sm:$0xf]
    %v65 = vld [vmem:[#allocation4 + $0x24] sm:$0xf]
    %v66 = vld [vmem:[#allocation4 + $0x28] sm:$0xf]
    %v67 = vld [vmem:[#allocation4 + $0x2c] sm:$0xf]
    %v68 = vld [vmem:[#allocation4 + $0x30] sm:$0xf]
    %v69 = vld [vmem:[#allocation4 + $0x34] sm:$0xf]
    %v70 = vld [vmem:[#allocation4 + $0x38] sm:$0xf]
    %v71 = vld [vmem:[#allocation4 + $0x3c] sm:$0xf]
    %v88 = vunpack.c.l.b16 %v40
    %v89 = vunpack.c.l.b16 %v41
    %v90 = vunpack.c.l.b16 %v42
    %v91 = vunpack.c.l.b16 %v43
    %v92 = vunpack.c.l.b16 %v44
    %v93 = vunpack.c.l.b16 %v45
    %v94 = vunpack.c.l.b16 %v46
    %v95 = vunpack.c.l.b16 %v47
    %v96 = vunpack.c.l.b16 %v48
    %v97 = vunpack.c.l.b16 %v49
    %v98 = vunpack.c.l.b16 %v50
    %v99 = vunpack.c.l.b16 %v51
    %v100 = vunpack.c.l.b16 %v52
    %v101 = vunpack.c.l.b16 %v53
    %v102 = vunpack.c.l.b16 %v54
    %v103 = vunpack.c.l.b16 %v55
    %v104 = vpack.c.b16 %v89, %v88
    %v105 = vpack.c.b16 %v91, %v90
    %v106 = vpack.c.b16 %v93, %v92
    %v107 = vpack.c.b16 %v95, %v94
    %v108 = vpack.c.b16 %v97, %v96
    %v109 = vpack.c.b16 %v99, %v98
    %v110 = vpack.c.b16 %v101, %v100
    %v111 = vpack.c.b16 %v103, %v102
    %v136 = vunpack.c.l.b16 %v56
    %v137 = vunpack.c.l.b16 %v57
    %v138 = vunpack.c.l.b16 %v58
    %v139 = vunpack.c.l.b16 %v59
    %v140 = vunpack.c.l.b16 %v60
    %v141 = vunpack.c.l.b16 %v61
    %v142 = vunpack.c.l.b16 %v62
    %v143 = vunpack.c.l.b16 %v63
    %v144 = vunpack.c.l.b16 %v64
    %v145 = vunpack.c.l.b16 %v65
    %v146 = vunpack.c.l.b16 %v66
    %v147 = vunpack.c.l.b16 %v67
    %v148 = vunpack.c.l.b16 %v68
    %v149 = vunpack.c.l.b16 %v69
    %v150 = vunpack.c.l.b16 %v70
    %v151 = vunpack.c.l.b16 %v71
    %v152 = vpack.c.b16 %v137, %v136
    %v153 = vpack.c.b16 %v139, %v138
    %v154 = vpack.c.b16 %v141, %v140
    %v155 = vpack.c.b16 %v143, %v142
    %v156 = vpack.c.b16 %v145, %v144
    %v157 = vpack.c.b16 %v147, %v146
    %v158 = vpack.c.b16 %v149, %v148
    %v159 = vpack.c.b16 %v151, %v150
    %168 = vmatprep.subr.bf16.mxu0 0
    %169 = vmatpush1.bf16.msra.mxu0 %v152
    %170 = vmatprep.subr.bf16.mxu0 0
    %171 = vmatpush1.bf16.msra.mxu0 %v153
    %172 = vmatprep.subr.bf16.mxu0 0
    %173 = vmatpush1.bf16.msra.mxu0 %v154
    %174 = vmatprep.subr.bf16.mxu0 0
    %175 = vmatpush1.bf16.msra.mxu0 %v155
    %176 = vmatprep.subr.bf16.mxu0 0
    %177 = vmatpush1.bf16.msra.mxu0 %v156
    %178 = vmatprep.subr.bf16.mxu0 0
    %179 = vmatpush1.bf16.msra.mxu0 %v157
    %180 = vmatprep.subr.bf16.mxu0 0
    %181 = vmatpush1.bf16.msra.mxu0 %v158
    %182 = vmatprep.subr.bf16.mxu0 0
    %183 = vmatpush1.bf16.msra.mxu0 %v159
    %184 = vmatprep.subr.bf16.mxu0 0
    %185 = vmatpush1.bf16.msra.mxu0 0
    %186 = vmatprep.subr.bf16.mxu0 0
    %187 = vmatpush1.bf16.msra.mxu0 0
    %188 = vmatprep.subr.bf16.mxu0 0
    %189 = vmatpush1.bf16.msra.mxu0 0
    %190 = vmatprep.subr.bf16.mxu0 0
    %191 = vmatpush1.bf16.msra.mxu0 0
    %192 = vmatprep.subr.bf16.mxu0 0
    %193 = vmatpush1.bf16.msra.mxu0 0
    %194 = vmatprep.subr.bf16.mxu0 0
    %195 = vmatpush1.bf16.msra.mxu0 0
    %196 = vmatprep.subr.bf16.mxu0 0
    %197 = vmatpush1.bf16.msra.mxu0 0
    %198 = vmatprep.subr.bf16.mxu0 0
    %199 = vmatpush1.bf16.msra.mxu0 0
    %200 = vmatprep.mubr.bf16.mxu0 0
    %201 = vmatmul.mubr.bf16.gmra.mrb[0].mxu0 %v104
    %v202 = vpop.f32.mrb[0].mxu0
    %v203 = vadd.f32 0.0, %v202
    %v204 = vpop.f32.mrb[0].mxu0
    %v205 = vpop.f32.mrb[0].mxu0
    %v206 = vadd.f32 0.0, %v205
    %v207 = vpop.f32.mrb[0].mxu0
    %208 = vmatprep.mubr.bf16.mxu0 0
    %209 = vmatmul.mubr.bf16.gmra.mrb[0].mxu0 %v105
    %v210 = vpop.f32.mrb[0].mxu0
    %v211 = vadd.f32 0.0, %v210
    %v212 = vpop.f32.mrb[0].mxu0
    %v213 = vpop.f32.mrb[0].mxu0
    %v214 = vadd.f32 0.0, %v213
    %v215 = vpop.f32.mrb[0].mxu0
    %216 = vmatprep.mubr.bf16.mxu0 0
    %217 = vmatmul.mubr.bf16.gmra.mrb[0].mxu0 %v106
    %v218 = vpop.f32.mrb[0].mxu0
    %v219 = vadd.f32 0.0, %v218
    %v220 = vpop.f32.mrb[0].mxu0
    %v221 = vpop.f32.mrb[0].mxu0
    %v222 = vadd.f32 0.0, %v221
    %v223 = vpop.f32.mrb[0].mxu0
    %224 = vmatprep.mubr.bf16.mxu0 0
    %225 = vmatmul.mubr.bf16.gmra.mrb[0].mxu0 %v107
    %v226 = vpop.f32.mrb[0].mxu0
    %v227 = vadd.f32 0.0, %v226
    %v228 = vpop.f32.mrb[0].mxu0
    %v229 = vpop.f32.mrb[0].mxu0
    %v230 = vadd.f32 0.0, %v229
    %v231 = vpop.f32.mrb[0].mxu0
    %232 = vmatprep.mubr.bf16.mxu0 0
    %233 = vmatmul.mubr.bf16.gmra.mrb[0].mxu0 %v108
    %v234 = vpop.f32.mrb[0].mxu0
    %v235 = vadd.f32 0.0, %v234
    %v236 = vpop.f32.mrb[0].mxu0
    %v237 = vpop.f32.mrb[0].mxu0
    %v238 = vadd.f32 0.0, %v237
    %v239 = vpop.f32.mrb[0].mxu0
    %240 = vmatprep.mubr.bf16.mxu0 0
    %241 = vmatmul.mubr.bf16.gmra.mrb[0].mxu0 %v109
    %v242 = vpop.f32.mrb[0].mxu0
    %v243 = vadd.f32 0.0, %v242
    %v244 = vpop.f32.mrb[0].mxu0
    %v245 = vpop.f32.mrb[0].mxu0
    %v246 = vadd.f32 0.0, %v245
    %v247 = vpop.f32.mrb[0].mxu0
    %248 = vmatprep.mubr.bf16.mxu0 0
    %249 = vmatmul.mubr.bf16.gmra.mrb[0].mxu0 %v110
    %v250 = vpop.f32.mrb[0].mxu0
    %v251 = vadd.f32 0.0, %v250
    %v252 = vpop.f32.mrb[0].mxu0
    %v253 = vpop.f32.mrb[0].mxu0
    %v254 = vadd.f32 0.0, %v253
    %v255 = vpop.f32.mrb[0].mxu0
    %256 = vmatprep.mubr.bf16.mxu0 0
    %257 = vmatmul.mubr.bf16.gmra.mrb[0].mxu0 %v111
    %v258 = vpop.f32.mrb[0].mxu0
    %v259 = vadd.f32 0.0, %v258
    %v260 = vpop.f32.mrb[0].mxu0
    %v261 = vpop.f32.mrb[0].mxu0
    %v262 = vadd.f32 0.0, %v261
    %v263 = vpop.f32.mrb[0].mxu0
    %264 = vdwg.mxu0
    %v265 = vpack.c.bf16 %v206, %v203
    %v266 = vpack.c.bf16 %v214, %v211
    %v267 = vpack.c.bf16 %v222, %v219
    %v268 = vpack.c.bf16 %v230, %v227
    %v269 = vpack.c.bf16 %v238, %v235
    %v270 = vpack.c.bf16 %v246, %v243
    %v271 = vpack.c.bf16 %v254, %v251
    %v272 = vpack.c.bf16 %v262, %v259
    %v281 = vunpack.c.l.b16 %v265
    %v282 = vunpack.c.h.b16 %v265
    %v283 = vunpack.c.l.b16 %v266
    %v284 = vunpack.c.h.b16 %v266
    %v285 = vunpack.c.l.b16 %v267
    %v286 = vunpack.c.h.b16 %v267
    %v287 = vunpack.c.l.b16 %v268
    %v288 = vunpack.c.h.b16 %v268
    %v289 = vunpack.c.l.b16 %v269
    %v290 = vunpack.c.h.b16 %v269
    %v291 = vunpack.c.l.b16 %v270
    %v292 = vunpack.c.h.b16 %v270
    %v293 = vunpack.c.l.b16 %v271
    %v294 = vunpack.c.h.b16 %v271
    %v295 = vunpack.c.l.b16 %v272
    %v296 = vunpack.c.h.b16 %v272
    %v297 = vpack.c.b16 %v281, %v281
    %v298 = vpack.c.b16 %v282, %v282
    %v299 = vpack.c.b16 %v283, %v283
    %v300 = vpack.c.b16 %v284, %v284
    %v301 = vpack.c.b16 %v285, %v285
    %v302 = vpack.c.b16 %v286, %v286
    %v303 = vpack.c.b16 %v287, %v287
    %v304 = vpack.c.b16 %v288, %v288
    %v305 = vpack.c.b16 %v289, %v289
    %v306 = vpack.c.b16 %v290, %v290
    %v307 = vpack.c.b16 %v291, %v291
    %v308 = vpack.c.b16 %v292, %v292
    %v309 = vpack.c.b16 %v293, %v293
    %v310 = vpack.c.b16 %v294, %v294
    %v311 = vpack.c.b16 %v295, %v295
    %v312 = vpack.c.b16 %v296, %v296
    %329 = vst [vmem:[%s2] sm:$0xf] %v297
    %330 = vst [vmem:[%s2 + $0x4] sm:$0xf] %v298
    %331 = vst [vmem:[%s2 + $0x8] sm:$0xf] %v299
    %332 = vst [vmem:[%s2 + $0xc] sm:$0xf] %v300
    %333 = vst [vmem:[%s2 + $0x10] sm:$0xf] %v301
    %334 = vst [vmem:[%s2 + $0x14] sm:$0xf] %v302
    %335 = vst [vmem:[%s2 + $0x18] sm:$0xf] %v303
    %336 = vst [vmem:[%s2 + $0x1c] sm:$0xf] %v304
    %337 = vst [vmem:[%s2 + $0x20] sm:$0xf] %v305
    %338 = vst [vmem:[%s2 + $0x24] sm:$0xf] %v306
    %339 = vst [vmem:[%s2 + $0x28] sm:$0xf] %v307
    %340 = vst [vmem:[%s2 + $0x2c] sm:$0xf] %v308
    %341 = vst [vmem:[%s2 + $0x30] sm:$0xf] %v309
    %342 = vst [vmem:[%s2 + $0x34] sm:$0xf] %v310
    %343 = vst [vmem:[%s2 + $0x38] sm:$0xf] %v311
    %344 = vst [vmem:[%s2 + $0x3c] sm:$0xf] %v312
    // Predicated region
    $region18: #{gcn3_forward_padded.4} parent=1 // pred_check
      _
    $region19: #{gcn3_forward_padded.4} parent=1 // pred_check_branch
      %346 = sbr.rel (0) target = $region21
    $region20: #{gcn3_forward_padded.4} parent=1 // pred_region
      _
    $region21: #{gcn3_forward_padded.4} parent=1 // pred_fallthru
      _
    // Predicated region
    $region22: #{gcn3_forward_padded.4} parent=1 // pred_check
      _
    $region23: #{gcn3_forward_padded.4} parent=1 // pred_check_branch
      %348 = sbr.rel (0) target = $region25
    $region24: #{gcn3_forward_padded.4} parent=1 // pred_region
      _
    $region25: #{gcn3_forward_padded.4} parent=1 // pred_fallthru
      _
    %349 = vsyncpa [#allocation3], 1
    %350 = vsyncpa [#allocation5], 1

// kernel: gcn3_forward_padded.7
$region0: #{gcn3_forward_padded.7}
  #allocation0 [shape = 'u32[]', space=smem, size = 0x4, offset = 0x4, fixed_abs, tag = 'smem constant byte address 0x4 - core index']
  #allocation1 [shape = 'u32[144,128]{1,0:T(1,128)}', space=vmem, size = 0x12000, scoped, tag = 'internal scratch']
  #allocation2 [shape = 'f32[128,128]{1,0:T(8,128)}', space=vmem, size = 0x10000, scoped, tag = 'scratch operand']
  %s0 = inlined_call_operand.vmem [shape: bf16[128,128], index: 0, kind: input, shape index: {}]
  %s1 = inlined_call_operand.vmem [shape: bf16[128,128], index: 1, kind: input, shape index: {}]
  %s2 = inlined_call_operand.vmem [shape: f32[1,128], index: 2, kind: input, shape index: {}]
  %s3 = inlined_call_operand.hbm [shape: f32[128,128], index: 3, kind: output, shape index: {}]
  %s4 = sld [smem:[#allocation0]]
  $region30: #{gcn3_forward_padded.7} parent=0
    _
  %s6 = ssub.s32 1, %s4
  %s7 = scalar_select 0, %s6, %s4
  $region1: #{gcn3_forward_padded.7} parent=0
    #allocation3 [shape = 'u8[65536]{0}', space=vmem, size = 0x10000, scoped, tag = 'output window, operand 0, single buffered']
    #allocation4 [shape = 's32[1]{0}', space=sflag, size = 0x4, scoped, tag = 'scoped memory for gcn3_forward_padded.7']
    %8 = vsyncpa [#allocation4], 0
    // Predicated region
    $region2: #{gcn3_forward_padded.7} parent=1 // pred_check
      _
    $region3: #{gcn3_forward_padded.7} parent=1 // pred_check_branch
      %10 = sbr.rel (0) target = $region5
    $region4: #{gcn3_forward_padded.7} parent=1 // pred_region
      _
    $region5: #{gcn3_forward_padded.7} parent=1 // pred_fallthru
      _
    // Predicated region
    $region6: #{gcn3_forward_padded.7} parent=1 // pred_check
      _
    $region7: #{gcn3_forward_padded.7} parent=1 // pred_check_branch
      %12 = sbr.rel (0) target = $region9
    $region8: #{gcn3_forward_padded.7} parent=1 // pred_region
      _
    $region9: #{gcn3_forward_padded.7} parent=1 // pred_fallthru
      _
    // Predicated region
    $region10: #{gcn3_forward_padded.7} parent=1 // pred_check
      _
    $region11: #{gcn3_forward_padded.7} parent=1 // pred_check_branch
      %14 = sbr.rel (0) target = $region13
    $region12: #{gcn3_forward_padded.7} parent=1 // pred_region
      _
    $region13: #{gcn3_forward_padded.7} parent=1 // pred_fallthru
      _
    %p16 = scmp.eq.s32.totalorder 0, 0
    // Predicated region
    $region14: #{gcn3_forward_padded.7} parent=1 // pred_check
      %p17 = pneg %p16
    $region15: #{gcn3_forward_padded.7} parent=1 // pred_check_branch
      %19 = sbr.rel (%p17) target = $region17
    $region16: #{gcn3_forward_padded.7} parent=1 // pred_region
      %20 = vst [vmem:[#allocation2] sm:$0xff] 0.0
      %21 = vst [vmem:[#allocation2 + $0x8] sm:$0xff] 0.0
      %22 = vst [vmem:[#allocation2 + $0x10] sm:$0xff] 0.0
      %23 = vst [vmem:[#allocation2 + $0x18] sm:$0xff] 0.0
      %24 = vst [vmem:[#allocation2 + $0x20] sm:$0xff] 0.0
      %25 = vst [vmem:[#allocation2 + $0x28] sm:$0xff] 0.0
      %26 = vst [vmem:[#allocation2 + $0x30] sm:$0xff] 0.0
      %27 = vst [vmem:[#allocation2 + $0x38] sm:$0xff] 0.0
      %28 = vst [vmem:[#allocation2 + $0x40] sm:$0xff] 0.0
      %29 = vst [vmem:[#allocation2 + $0x48] sm:$0xff] 0.0
      %30 = vst [vmem:[#allocation2 + $0x50] sm:$0xff] 0.0
      %31 = vst [vmem:[#allocation2 + $0x58] sm:$0xff] 0.0
      %32 = vst [vmem:[#allocation2 + $0x60] sm:$0xff] 0.0
      %33 = vst [vmem:[#allocation2 + $0x68] sm:$0xff] 0.0
      %34 = vst [vmem:[#allocation2 + $0x70] sm:$0xff] 0.0
      %35 = vst [vmem:[#allocation2 + $0x78] sm:$0xff] 0.0
    $region17: #{gcn3_forward_padded.7} parent=1 // pred_fallthru
      _
    %s36 = smul.u32 0, 128
    %s37 = sshra.s32 %s36, 3
    %s38 = sand.u32 %s36, 7
    %s39 = smul.addr %s37, 4
    %s40 = scalar_lea.vmem %s1, %s39
    %v41 = vld [vmem:[%s40] sm:$0xf]
    %v42 = vld [vmem:[%s40 + $0x4] sm:$0xf]
    %v43 = vld [vmem:[%s40 + $0x8] sm:$0xf]
    %v44 = vld [vmem:[%s40 + $0xc] sm:$0xf]
    %v45 = vld [vmem:[%s40 + $0x10] sm:$0xf]
    %v46 = vld [vmem:[%s40 + $0x14] sm:$0xf]
    %v47 = vld [vmem:[%s40 + $0x18] sm:$0xf]
    %v48 = vld [vmem:[%s40 + $0x1c] sm:$0xf]
    %v49 = vld [vmem:[%s40 + $0x20] sm:$0xf]
    %v50 = vld [vmem:[%s40 + $0x24] sm:$0xf]
    %v51 = vld [vmem:[%s40 + $0x28] sm:$0xf]
    %v52 = vld [vmem:[%s40 + $0x2c] sm:$0xf]
    %v53 = vld [vmem:[%s40 + $0x30] sm:$0xf]
    %v54 = vld [vmem:[%s40 + $0x34] sm:$0xf]
    %v55 = vld [vmem:[%s40 + $0x38] sm:$0xf]
    %v56 = vld [vmem:[%s40 + $0x3c] sm:$0xf]
    %v57 = vld [vmem:[#allocation2] sm:$0xff]
    %v58 = vld [vmem:[#allocation2 + $0x8] sm:$0xff]
    %v59 = vld [vmem:[#allocation2 + $0x10] sm:$0xff]
    %v60 = vld [vmem:[#allocation2 + $0x18] sm:$0xff]
    %v61 = vld [vmem:[#allocation2 + $0x20] sm:$0xff]
    %v62 = vld [vmem:[#allocation2 + $0x28] sm:$0xff]
    %v63 = vld [vmem:[#allocation2 + $0x30] sm:$0xff]
    %v64 = vld [vmem:[#allocation2 + $0x38] sm:$0xff]
    %v65 = vld [vmem:[#allocation2 + $0x40] sm:$0xff]
    %v66 = vld [vmem:[#allocation2 + $0x48] sm:$0xff]
    %v67 = vld [vmem:[#allocation2 + $0x50] sm:$0xff]
    %v68 = vld [vmem:[#allocation2 + $0x58] sm:$0xff]
    %v69 = vld [vmem:[#allocation2 + $0x60] sm:$0xff]
    %v70 = vld [vmem:[#allocation2 + $0x68] sm:$0xff]
    %v71 = vld [vmem:[#allocation2 + $0x70] sm:$0xff]
    %v72 = vld [vmem:[#allocation2 + $0x78] sm:$0xff]
    %v73 = vld [vmem:[%s0] sm:$0xf]
    %v74 = vld [vmem:[%s0 + $0x4] sm:$0xf]
    %v75 = vld [vmem:[%s0 + $0x8] sm:$0xf]
    %v76 = vld [vmem:[%s0 + $0xc] sm:$0xf]
    %v77 = vld [vmem:[%s0 + $0x10] sm:$0xf]
    %v78 = vld [vmem:[%s0 + $0x14] sm:$0xf]
    %v79 = vld [vmem:[%s0 + $0x18] sm:$0xf]
    %v80 = vld [vmem:[%s0 + $0x1c] sm:$0xf]
    %v81 = vld [vmem:[%s0 + $0x20] sm:$0xf]
    %v82 = vld [vmem:[%s0 + $0x24] sm:$0xf]
    %v83 = vld [vmem:[%s0 + $0x28] sm:$0xf]
    %v84 = vld [vmem:[%s0 + $0x2c] sm:$0xf]
    %v85 = vld [vmem:[%s0 + $0x30] sm:$0xf]
    %v86 = vld [vmem:[%s0 + $0x34] sm:$0xf]
    %v87 = vld [vmem:[%s0 + $0x38] sm:$0xf]
    %v88 = vld [vmem:[%s0 + $0x3c] sm:$0xf]
    %v105 = vunpack.c.l.b16 %v73
    %v106 = vunpack.c.l.b16 %v74
    %v107 = vunpack.c.l.b16 %v75
    %v108 = vunpack.c.l.b16 %v76
    %v109 = vunpack.c.l.b16 %v77
    %v110 = vunpack.c.l.b16 %v78
    %v111 = vunpack.c.l.b16 %v79
    %v112 = vunpack.c.l.b16 %v80
    %v113 = vunpack.c.l.b16 %v81
    %v114 = vunpack.c.l.b16 %v82
    %v115 = vunpack.c.l.b16 %v83
    %v116 = vunpack.c.l.b16 %v84
    %v117 = vunpack.c.l.b16 %v85
    %v118 = vunpack.c.l.b16 %v86
    %v119 = vunpack.c.l.b16 %v87
    %v120 = vunpack.c.l.b16 %v88
    %v121 = vpack.c.b16 %v106, %v105
    %v122 = vpack.c.b16 %v108, %v107
    %v123 = vpack.c.b16 %v110, %v109
    %v124 = vpack.c.b16 %v112, %v111
    %v125 = vpack.c.b16 %v114, %v113
    %v126 = vpack.c.b16 %v116, %v115
    %v127 = vpack.c.b16 %v118, %v117
    %v128 = vpack.c.b16 %v120, %v119
    %v153 = vunpack.c.l.b16 %v41
    %v154 = vunpack.c.l.b16 %v42
    %v155 = vunpack.c.l.b16 %v43
    %v156 = vunpack.c.l.b16 %v44
    %v157 = vunpack.c.l.b16 %v45
    %v158 = vunpack.c.l.b16 %v46
    %v159 = vunpack.c.l.b16 %v47
    %v160 = vunpack.c.l.b16 %v48
    %v161 = vunpack.c.l.b16 %v49
    %v162 = vunpack.c.l.b16 %v50
    %v163 = vunpack.c.l.b16 %v51
    %v164 = vunpack.c.l.b16 %v52
    %v165 = vunpack.c.l.b16 %v53
    %v166 = vunpack.c.l.b16 %v54
    %v167 = vunpack.c.l.b16 %v55
    %v168 = vunpack.c.l.b16 %v56
    %v169 = vpack.c.b16 %v154, %v153
    %v170 = vpack.c.b16 %v156, %v155
    %v171 = vpack.c.b16 %v158, %v157
    %v172 = vpack.c.b16 %v160, %v159
    %v173 = vpack.c.b16 %v162, %v161
    %v174 = vpack.c.b16 %v164, %v163
    %v175 = vpack.c.b16 %v166, %v165
    %v176 = vpack.c.b16 %v168, %v167
    %185 = vmatprep.subr.bf16.mxu0 0
    %186 = vmatpush1.bf16.msra.mxu0 %v169
    %187 = vmatprep.subr.bf16.mxu0 0
    %188 = vmatpush1.bf16.msra.mxu0 %v170
    %189 = vmatprep.subr.bf16.mxu0 0
    %190 = vmatpush1.bf16.msra.mxu0 %v171
    %191 = vmatprep.subr.bf16.mxu0 0
    %192 = vmatpush1.bf16.msra.mxu0 %v172
    %193 = vmatprep.subr.bf16.mxu0 0
    %194 = vmatpush1.bf16.msra.mxu0 %v173
    %195 = vmatprep.subr.bf16.mxu0 0
    %196 = vmatpush1.bf16.msra.mxu0 %v174
    %197 = vmatprep.subr.bf16.mxu0 0
    %198 = vmatpush1.bf16.msra.mxu0 %v175
    %199 = vmatprep.subr.bf16.mxu0 0
    %200 = vmatpush1.bf16.msra.mxu0 %v176
    %201 = vmatprep.subr.bf16.mxu0 0
    %202 = vmatpush1.bf16.msra.mxu0 0
    %203 = vmatprep.subr.bf16.mxu0 0
    %204 = vmatpush1.bf16.msra.mxu0 0
    %205 = vmatprep.subr.bf16.mxu0 0
    %206 = vmatpush1.bf16.msra.mxu0 0
    %207 = vmatprep.subr.bf16.mxu0 0
    %208 = vmatpush1.bf16.msra.mxu0 0
    %209 = vmatprep.subr.bf16.mxu0 0
    %210 = vmatpush1.bf16.msra.mxu0 0
    %211 = vmatprep.subr.bf16.mxu0 0
    %212 = vmatpush1.bf16.msra.mxu0 0
    %213 = vmatprep.subr.bf16.mxu0 0
    %214 = vmatpush1.bf16.msra.mxu0 0
    %215 = vmatprep.subr.bf16.mxu0 0
    %216 = vmatpush1.bf16.msra.mxu0 0
    %217 = vmatprep.mubr.bf16.mxu0 0
    %218 = vmatmul.mubr.bf16.gmra.mrb[0].mxu0 %v121
    %v219 = vpop.f32.mrb[0].mxu0
    %v220 = vadd.f32 0.0, %v219
    %v221 = vpop.f32.mrb[0].mxu0
    %v222 = vpop.f32.mrb[0].mxu0
    %v223 = vadd.f32 0.0, %v222
    %v224 = vpop.f32.mrb[0].mxu0
    %225 = vmatprep.mubr.bf16.mxu0 0
    %226 = vmatmul.mubr.bf16.gmra.mrb[0].mxu0 %v122
    %v227 = vpop.f32.mrb[0].mxu0
    %v228 = vadd.f32 0.0, %v227
    %v229 = vpop.f32.mrb[0].mxu0
    %v230 = vpop.f32.mrb[0].mxu0
    %v231 = vadd.f32 0.0, %v230
    %v232 = vpop.f32.mrb[0].mxu0
    %233 = vmatprep.mubr.bf16.mxu0 0
    %234 = vmatmul.mubr.bf16.gmra.mrb[0].mxu0 %v123
    %v235 = vpop.f32.mrb[0].mxu0
    %v236 = vadd.f32 0.0, %v235
    %v237 = vpop.f32.mrb[0].mxu0
    %v238 = vpop.f32.mrb[0].mxu0
    %v239 = vadd.f32 0.0, %v238
    %v240 = vpop.f32.mrb[0].mxu0
    %241 = vmatprep.mubr.bf16.mxu0 0
    %242 = vmatmul.mubr.bf16.gmra.mrb[0].mxu0 %v124
    %v243 = vpop.f32.mrb[0].mxu0
    %v244 = vadd.f32 0.0, %v243
    %v245 = vpop.f32.mrb[0].mxu0
    %v246 = vpop.f32.mrb[0].mxu0
    %v247 = vadd.f32 0.0, %v246
    %v248 = vpop.f32.mrb[0].mxu0
    %249 = vmatprep.mubr.bf16.mxu0 0
    %250 = vmatmul.mubr.bf16.gmra.mrb[0].mxu0 %v125
    %v251 = vpop.f32.mrb[0].mxu0
    %v252 = vadd.f32 0.0, %v251
    %v253 = vpop.f32.mrb[0].mxu0
    %v254 = vpop.f32.mrb[0].mxu0
    %v255 = vadd.f32 0.0, %v254
    %v256 = vpop.f32.mrb[0].mxu0
    %257 = vmatprep.mubr.bf16.mxu0 0
    %258 = vmatmul.mubr.bf16.gmra.mrb[0].mxu0 %v126
    %v259 = vpop.f32.mrb[0].mxu0
    %v260 = vadd.f32 0.0, %v259
    %v261 = vpop.f32.mrb[0].mxu0
    %v262 = vpop.f32.mrb[0].mxu0
    %v263 = vadd.f32 0.0, %v262
    %v264 = vpop.f32.mrb[0].mxu0
    %265 = vmatprep.mubr.bf16.mxu0 0
    %266 = vmatmul.mubr.bf16.gmra.mrb[0].mxu0 %v127
    %v267 = vpop.f32.mrb[0].mxu0
    %v268 = vadd.f32 0.0, %v267
    %v269 = vpop.f32.mrb[0].mxu0
    %v270 = vpop.f32.mrb[0].mxu0
    %v271 = vadd.f32 0.0, %v270
    %v272 = vpop.f32.mrb[0].mxu0
    %273 = vmatprep.mubr.bf16.mxu0 0
    %274 = vmatmul.mubr.bf16.gmra.mrb[0].mxu0 %v128
    %v275 = vpop.f32.mrb[0].mxu0
    %v276 = vadd.f32 0.0, %v275
    %v277 = vpop.f32.mrb[0].mxu0
    %v278 = vpop.f32.mrb[0].mxu0
    %v279 = vadd.f32 0.0, %v278
    %v280 = vpop.f32.mrb[0].mxu0
    %281 = vdwg.mxu0
    %v282 = vadd.f32 %v57, %v220
    %v283 = vadd.f32 %v58, %v223
    %v284 = vadd.f32 %v59, %v228
    %v285 = vadd.f32 %v60, %v231
    %v286 = vadd.f32 %v61, %v236
    %v287 = vadd.f32 %v62, %v239
    %v288 = vadd.f32 %v63, %v244
    %v289 = vadd.f32 %v64, %v247
    %v290 = vadd.f32 %v65, %v252
    %v291 = vadd.f32 %v66, %v255
    %v292 = vadd.f32 %v67, %v260
    %v293 = vadd.f32 %v68, %v263
    %v294 = vadd.f32 %v69, %v268
    %v295 = vadd.f32 %v70, %v271
    %v296 = vadd.f32 %v71, %v276
    %v297 = vadd.f32 %v72, %v279
    %298 = vst [vmem:[#allocation2] sm:$0xff] %v282
    %299 = vst [vmem:[#allocation2 + $0x8] sm:$0xff] %v283
    %300 = vst [vmem:[#allocation2 + $0x10] sm:$0xff] %v284
    %301 = vst [vmem:[#allocation2 + $0x18] sm:$0xff] %v285
    %302 = vst [vmem:[#allocation2 + $0x20] sm:$0xff] %v286
    %303 = vst [vmem:[#allocation2 + $0x28] sm:$0xff] %v287
    %304 = vst [vmem:[#allocation2 + $0x30] sm:$0xff] %v288
    %305 = vst [vmem:[#allocation2 + $0x38] sm:$0xff] %v289
    %306 = vst [vmem:[#allocation2 + $0x40] sm:$0xff] %v290
    %307 = vst [vmem:[#allocation2 + $0x48] sm:$0xff] %v291
    %308 = vst [vmem:[#allocation2 + $0x50] sm:$0xff] %v292
    %309 = vst [vmem:[#allocation2 + $0x58] sm:$0xff] %v293
    %310 = vst [vmem:[#allocation2 + $0x60] sm:$0xff] %v294
    %311 = vst [vmem:[#allocation2 + $0x68] sm:$0xff] %v295
    %312 = vst [vmem:[#allocation2 + $0x70] sm:$0xff] %v296
    %313 = vst [vmem:[#allocation2 + $0x78] sm:$0xff] %v297
    // Predicated region
    $region18: #{gcn3_forward_padded.7} parent=1 // pred_check
      %p314 = pneg %p16
    $region19: #{gcn3_forward_padded.7} parent=1 // pred_check_branch
      %316 = sbr.rel (%p314) target = $region21
    $region20: #{gcn3_forward_padded.7} parent=1 // pred_region
      %v317 = vld [vmem:[#allocation2] sm:$0xff]
      %v318 = vld [vmem:[#allocation2 + $0x8] sm:$0xff]
      %v319 = vld [vmem:[#allocation2 + $0x10] sm:$0xff]
      %v320 = vld [vmem:[#allocation2 + $0x18] sm:$0xff]
      %v321 = vld [vmem:[#allocation2 + $0x20] sm:$0xff]
      %v322 = vld [vmem:[#allocation2 + $0x28] sm:$0xff]
      %v323 = vld [vmem:[#allocation2 + $0x30] sm:$0xff]
      %v324 = vld [vmem:[#allocation2 + $0x38] sm:$0xff]
      %v325 = vld [vmem:[#allocation2 + $0x40] sm:$0xff]
      %v326 = vld [vmem:[#allocation2 + $0x48] sm:$0xff]
      %v327 = vld [vmem:[#allocation2 + $0x50] sm:$0xff]
      %v328 = vld [vmem:[#allocation2 + $0x58] sm:$0xff]
      %v329 = vld [vmem:[#allocation2 + $0x60] sm:$0xff]
      %v330 = vld [vmem:[#allocation2 + $0x68] sm:$0xff]
      %v331 = vld [vmem:[#allocation2 + $0x70] sm:$0xff]
      %v332 = vld [vmem:[#allocation2 + $0x78] sm:$0xff]
      %v333 = vld [vmem:[%s2] sm:$0x1]
      %v335 = vlaneseq
      %v336 = vshrl.u32 %v335, 7
      %v337 = vsub.s32 0, %v336
      %v338 = vrot.slane %v333, %v337
      %v340 = vadd.f32 %v317, %v338
      %v341 = vadd.f32 %v318, %v338
      %v342 = vadd.f32 %v319, %v338
      %v343 = vadd.f32 %v320, %v338
      %v344 = vadd.f32 %v321, %v338
      %v345 = vadd.f32 %v322, %v338
      %v346 = vadd.f32 %v323, %v338
      %v347 = vadd.f32 %v324, %v338
      %v348 = vadd.f32 %v325, %v338
      %v349 = vadd.f32 %v326, %v338
      %v350 = vadd.f32 %v327, %v338
      %v351 = vadd.f32 %v328, %v338
      %v352 = vadd.f32 %v329, %v338
      %v353 = vadd.f32 %v330, %v338
      %v354 = vadd.f32 %v331, %v338
      %v355 = vadd.f32 %v332, %v338
      %356 = vst [vmem:[#allocation3] sm:$0xff] %v340
      %357 = vst [vmem:[#allocation3 + $0x8] sm:$0xff] %v341
      %358 = vst [vmem:[#allocation3 + $0x10] sm:$0xff] %v342
      %359 = vst [vmem:[#allocation3 + $0x18] sm:$0xff] %v343
      %360 = vst [vmem:[#allocation3 + $0x20] sm:$0xff] %v344
      %361 = vst [vmem:[#allocation3 + $0x28] sm:$0xff] %v345
      %362 = vst [vmem:[#allocation3 + $0x30] sm:$0xff] %v346
      %363 = vst [vmem:[#allocation3 + $0x38] sm:$0xff] %v347
      %364 = vst [vmem:[#allocation3 + $0x40] sm:$0xff] %v348
      %365 = vst [vmem:[#allocation3 + $0x48] sm:$0xff] %v349
      %366 = vst [vmem:[#allocation3 + $0x50] sm:$0xff] %v350
      %367 = vst [vmem:[#allocation3 + $0x58] sm:$0xff] %v351
      %368 = vst [vmem:[#allocation3 + $0x60] sm:$0xff] %v352
      %369 = vst [vmem:[#allocation3 + $0x68] sm:$0xff] %v353
      %370 = vst [vmem:[#allocation3 + $0x70] sm:$0xff] %v354
      %371 = vst [vmem:[#allocation3 + $0x78] sm:$0xff] %v355
    $region21: #{gcn3_forward_padded.7} parent=1 // pred_fallthru
      _
    // Predicated region
    $region22: #{gcn3_forward_padded.7} parent=1 // pred_check
      _
    $region23: #{gcn3_forward_padded.7} parent=1 // pred_check_branch
      %373 = sbr.rel (0) target = $region25
    $region24: #{gcn3_forward_padded.7} parent=1 // pred_region
      %s375 = ssub.s32 2048, 2048
      %376 = vsyncadd [#allocation4], %s375
      %s377 = sshll.u32 [#allocation3], 4
      %s378 = int_to_ptr.vmem [resolvable:$true] %s377
      %383 = dma.vmem_to_hbm [thread:$0]  %s378, 2048, %s3, [#allocation4], 128, 128, 8
    $region25: #{gcn3_forward_padded.7} parent=1 // pred_fallthru
      _
    // Predicated region
    $region26: #{gcn3_forward_padded.7} parent=1 // pred_check
      _
    $region27: #{gcn3_forward_padded.7} parent=1 // pred_check_branch
      %385 = sbr.rel (0) target = $region29
    $region28: #{gcn3_forward_padded.7} parent=1 // pred_region
      %386 = dma.done [#allocation4], 2048
    $region29: #{gcn3_forward_padded.7} parent=1 // pred_fallthru
      _
    %387 = vsyncpa [#allocation4], 1

// kernel: gcn3_forward_padded.5
$region0: #{gcn3_forward_padded.5}
  #allocation0 [shape = 'u32[]', space=smem, size = 0x4, offset = 0x4, fixed_abs, tag = 'smem constant byte address 0x4 - core index']
  #allocation1 [shape = 'u32[144,128]{1,0:T(1,128)}', space=vmem, size = 0x12000, scoped, tag = 'internal scratch']
  #allocation2 [shape = 'f32[128,128]{1,0:T(8,128)}', space=vmem, size = 0x10000, scoped, tag = 'scratch operand']
  %s0 = inlined_call_operand.vmem [shape: bf16[128,128], index: 0, kind: input, shape index: {}]
  %s1 = inlined_call_operand.vmem [shape: bf16[128,128], index: 1, kind: input, shape index: {}]
  %s2 = inlined_call_operand.vmem [shape: f32[1,128], index: 2, kind: input, shape index: {}]
  %s3 = inlined_call_operand.vmem [shape: bf16[128,128], index: 3, kind: input, shape index: {}]
  %s4 = inlined_call_operand.vmem [shape: bf16[128,128], index: 4, kind: output, shape index: {}]
  %s5 = sld [smem:[#allocation0]]
  $region34: #{gcn3_forward_padded.5} parent=0
    _
  %s7 = ssub.s32 1, %s5
  %s8 = scalar_select 0, %s7, %s5
  // Predicated region
  $region2: #{gcn3_forward_padded.5} parent=0 // pred_check
    _
  $region3: #{gcn3_forward_padded.5} parent=0 // pred_check_branch
    %10 = sbr.rel (0) target = $region5
  $region4: #{gcn3_forward_padded.5} parent=0 // pred_region
    _
  $region5: #{gcn3_forward_padded.5} parent=0 // pred_fallthru
    _
  // Predicated region
  $region6: #{gcn3_forward_padded.5} parent=0 // pred_check
    _
  $region7: #{gcn3_forward_padded.5} parent=0 // pred_check_branch
    %12 = sbr.rel (0) target = $region9
  $region8: #{gcn3_forward_padded.5} parent=0 // pred_region
    _
  $region9: #{gcn3_forward_padded.5} parent=0 // pred_fallthru
    _
  // Predicated region
  $region10: #{gcn3_forward_padded.5} parent=0 // pred_check
    _
  $region11: #{gcn3_forward_padded.5} parent=0 // pred_check_branch
    %14 = sbr.rel (0) target = $region13
  $region12: #{gcn3_forward_padded.5} parent=0 // pred_region
    _
  $region13: #{gcn3_forward_padded.5} parent=0 // pred_fallthru
    _
  // Predicated region
  $region14: #{gcn3_forward_padded.5} parent=0 // pred_check
    _
  $region15: #{gcn3_forward_padded.5} parent=0 // pred_check_branch
    %16 = sbr.rel (0) target = $region17
  $region16: #{gcn3_forward_padded.5} parent=0 // pred_region
    _
  $region17: #{gcn3_forward_padded.5} parent=0 // pred_fallthru
    _
  %p18 = scmp.eq.s32.totalorder 0, 0
  // Predicated region
  $region18: #{gcn3_forward_padded.5} parent=0 // pred_check
    %p19 = pneg %p18
  $region19: #{gcn3_forward_padded.5} parent=0 // pred_check_branch
    %21 = sbr.rel (%p19) target = $region21
  $region20: #{gcn3_forward_padded.5} parent=0 // pred_region
    %22 = vst [vmem:[#allocation2] sm:$0xff] 0.0
    %23 = vst [vmem:[#allocation2 + $0x8] sm:$0xff] 0.0
    %24 = vst [vmem:[#allocation2 + $0x10] sm:$0xff] 0.0
    %25 = vst [vmem:[#allocation2 + $0x18] sm:$0xff] 0.0
    %26 = vst [vmem:[#allocation2 + $0x20] sm:$0xff] 0.0
    %27 = vst [vmem:[#allocation2 + $0x28] sm:$0xff] 0.0
    %28 = vst [vmem:[#allocation2 + $0x30] sm:$0xff] 0.0
    %29 = vst [vmem:[#allocation2 + $0x38] sm:$0xff] 0.0
    %30 = vst [vmem:[#allocation2 + $0x40] sm:$0xff] 0.0
    %31 = vst [vmem:[#allocation2 + $0x48] sm:$0xff] 0.0
    %32 = vst [vmem:[#allocation2 + $0x50] sm:$0xff] 0.0
    %33 = vst [vmem:[#allocation2 + $0x58] sm:$0xff] 0.0
    %34 = vst [vmem:[#allocation2 + $0x60] sm:$0xff] 0.0
    %35 = vst [vmem:[#allocation2 + $0x68] sm:$0xff] 0.0
    %36 = vst [vmem:[#allocation2 + $0x70] sm:$0xff] 0.0
    %37 = vst [vmem:[#allocation2 + $0x78] sm:$0xff] 0.0
  $region21: #{gcn3_forward_padded.5} parent=0 // pred_fallthru
    _
  %s38 = smul.u32 0, 128
  %s39 = sshra.s32 %s38, 3
  %s40 = sand.u32 %s38, 7
  %s41 = smul.addr %s39, 4
  %s42 = scalar_lea.vmem %s1, %s41
  %v43 = vld [vmem:[%s42] sm:$0xf]
  %v44 = vld [vmem:[%s42 + $0x4] sm:$0xf]
  %v45 = vld [vmem:[%s42 + $0x8] sm:$0xf]
  %v46 = vld [vmem:[%s42 + $0xc] sm:$0xf]
  %v47 = vld [vmem:[%s42 + $0x10] sm:$0xf]
  %v48 = vld [vmem:[%s42 + $0x14] sm:$0xf]
  %v49 = vld [vmem:[%s42 + $0x18] sm:$0xf]
  %v50 = vld [vmem:[%s42 + $0x1c] sm:$0xf]
  %v51 = vld [vmem:[%s42 + $0x20] sm:$0xf]
  %v52 = vld [vmem:[%s42 + $0x24] sm:$0xf]
  %v53 = vld [vmem:[%s42 + $0x28] sm:$0xf]
  %v54 = vld [vmem:[%s42 + $0x2c] sm:$0xf]
  %v55 = vld [vmem:[%s42 + $0x30] sm:$0xf]
  %v56 = vld [vmem:[%s42 + $0x34] sm:$0xf]
  %v57 = vld [vmem:[%s42 + $0x38] sm:$0xf]
  %v58 = vld [vmem:[%s42 + $0x3c] sm:$0xf]
  %v59 = vld [vmem:[#allocation2] sm:$0xff]
  %v60 = vld [vmem:[#allocation2 + $0x8] sm:$0xff]
  %v61 = vld [vmem:[#allocation2 + $0x10] sm:$0xff]
  %v62 = vld [vmem:[#allocation2 + $0x18] sm:$0xff]
  %v63 = vld [vmem:[#allocation2 + $0x20] sm:$0xff]
  %v64 = vld [vmem:[#allocation2 + $0x28] sm:$0xff]
  %v65 = vld [vmem:[#allocation2 + $0x30] sm:$0xff]
  %v66 = vld [vmem:[#allocation2 + $0x38] sm:$0xff]
  %v67 = vld [vmem:[#allocation2 + $0x40] sm:$0xff]
  %v68 = vld [vmem:[#allocation2 + $0x48] sm:$0xff]
  %v69 = vld [vmem:[#allocation2 + $0x50] sm:$0xff]
  %v70 = vld [vmem:[#allocation2 + $0x58] sm:$0xff]
  %v71 = vld [vmem:[#allocation2 + $0x60] sm:$0xff]
  %v72 = vld [vmem:[#allocation2 + $0x68] sm:$0xff]
  %v73 = vld [vmem:[#allocation2 + $0x70] sm:$0xff]
  %v74 = vld [vmem:[#allocation2 + $0x78] sm:$0xff]
  %v75 = vld [vmem:[%s0] sm:$0xf]
  %v76 = vld [vmem:[%s0 + $0x4] sm:$0xf]
  %v77 = vld [vmem:[%s0 + $0x8] sm:$0xf]
  %v78 = vld [vmem:[%s0 + $0xc] sm:$0xf]
  %v79 = vld [vmem:[%s0 + $0x10] sm:$0xf]
  %v80 = vld [vmem:[%s0 + $0x14] sm:$0xf]
  %v81 = vld [vmem:[%s0 + $0x18] sm:$0xf]
  %v82 = vld [vmem:[%s0 + $0x1c] sm:$0xf]
  %v83 = vld [vmem:[%s0 + $0x20] sm:$0xf]
  %v84 = vld [vmem:[%s0 + $0x24] sm:$0xf]
  %v85 = vld [vmem:[%s0 + $0x28] sm:$0xf]
  %v86 = vld [vmem:[%s0 + $0x2c] sm:$0xf]
  %v87 = vld [vmem:[%s0 + $0x30] sm:$0xf]
  %v88 = vld [vmem:[%s0 + $0x34] sm:$0xf]
  %v89 = vld [vmem:[%s0 + $0x38] sm:$0xf]
  %v90 = vld [vmem:[%s0 + $0x3c] sm:$0xf]
  %v107 = vunpack.c.l.b16 %v75
  %v108 = vunpack.c.l.b16 %v76
  %v109 = vunpack.c.l.b16 %v77
  %v110 = vunpack.c.l.b16 %v78
  %v111 = vunpack.c.l.b16 %v79
  %v112 = vunpack.c.l.b16 %v80
  %v113 = vunpack.c.l.b16 %v81
  %v114 = vunpack.c.l.b16 %v82
  %v115 = vunpack.c.l.b16 %v83
  %v116 = vunpack.c.l.b16 %v84
  %v117 = vunpack.c.l.b16 %v85
  %v118 = vunpack.c.l.b16 %v86
  %v119 = vunpack.c.l.b16 %v87
  %v120 = vunpack.c.l.b16 %v88
  %v121 = vunpack.c.l.b16 %v89
  %v122 = vunpack.c.l.b16 %v90
  %v123 = vpack.c.b16 %v108, %v107
  %v124 = vpack.c.b16 %v110, %v109
  %v125 = vpack.c.b16 %v112, %v111
  %v126 = vpack.c.b16 %v114, %v113
  %v127 = vpack.c.b16 %v116, %v115
  %v128 = vpack.c.b16 %v118, %v117
  %v129 = vpack.c.b16 %v120, %v119
  %v130 = vpack.c.b16 %v122, %v121
  %v155 = vunpack.c.l.b16 %v43
  %v156 = vunpack.c.l.b16 %v44
  %v157 = vunpack.c.l.b16 %v45
  %v158 = vunpack.c.l.b16 %v46
  %v159 = vunpack.c.l.b16 %v47
  %v160 = vunpack.c.l.b16 %v48
  %v161 = vunpack.c.l.b16 %v49
  %v162 = vunpack.c.l.b16 %v50
  %v163 = vunpack.c.l.b16 %v51
  %v164 = vunpack.c.l.b16 %v52
  %v165 = vunpack.c.l.b16 %v53
  %v166 = vunpack.c.l.b16 %v54
  %v167 = vunpack.c.l.b16 %v55
  %v168 = vunpack.c.l.b16 %v56
  %v169 = vunpack.c.l.b16 %v57
  %v170 = vunpack.c.l.b16 %v58
  %v171 = vpack.c.b16 %v156, %v155
  %v172 = vpack.c.b16 %v158, %v157
  %v173 = vpack.c.b16 %v160, %v159
  %v174 = vpack.c.b16 %v162, %v161
  %v175 = vpack.c.b16 %v164, %v163
  %v176 = vpack.c.b16 %v166, %v165
  %v177 = vpack.c.b16 %v168, %v167
  %v178 = vpack.c.b16 %v170, %v169
  %187 = vmatprep.subr.bf16.mxu0 0
  %188 = vmatpush1.bf16.msra.mxu0 %v171
  %189 = vmatprep.subr.bf16.mxu0 0
  %190 = vmatpush1.bf16.msra.mxu0 %v172
  %191 = vmatprep.subr.bf16.mxu0 0
  %192 = vmatpush1.bf16.msra.mxu0 %v173
  %193 = vmatprep.subr.bf16.mxu0 0
  %194 = vmatpush1.bf16.msra.mxu0 %v174
  %195 = vmatprep.subr.bf16.mxu0 0
  %196 = vmatpush1.bf16.msra.mxu0 %v175
  %197 = vmatprep.subr.bf16.mxu0 0
  %198 = vmatpush1.bf16.msra.mxu0 %v176
  %199 = vmatprep.subr.bf16.mxu0 0
  %200 = vmatpush1.bf16.msra.mxu0 %v177
  %201 = vmatprep.subr.bf16.mxu0 0
  %202 = vmatpush1.bf16.msra.mxu0 %v178
  %203 = vmatprep.subr.bf16.mxu0 0
  %204 = vmatpush1.bf16.msra.mxu0 0
  %205 = vmatprep.subr.bf16.mxu0 0
  %206 = vmatpush1.bf16.msra.mxu0 0
  %207 = vmatprep.subr.bf16.mxu0 0
  %208 = vmatpush1.bf16.msra.mxu0 0
  %209 = vmatprep.subr.bf16.mxu0 0
  %210 = vmatpush1.bf16.msra.mxu0 0
  %211 = vmatprep.subr.bf16.mxu0 0
  %212 = vmatpush1.bf16.msra.mxu0 0
  %213 = vmatprep.subr.bf16.mxu0 0
  %214 = vmatpush1.bf16.msra.mxu0 0
  %215 = vmatprep.subr.bf16.mxu0 0
  %216 = vmatpush1.bf16.msra.mxu0 0
  %217 = vmatprep.subr.bf16.mxu0 0
  %218 = vmatpush1.bf16.msra.mxu0 0
  %219 = vmatprep.mubr.bf16.mxu0 0
  %220 = vmatmul.mubr.bf16.gmra.mrb[0].mxu0 %v123
  %v221 = vpop.f32.mrb[0].mxu0
  %v222 = vadd.f32 0.0, %v221
  %v223 = vpop.f32.mrb[0].mxu0
  %v224 = vpop.f32.mrb[0].mxu0
  %v225 = vadd.f32 0.0, %v224
  %v226 = vpop.f32.mrb[0].mxu0
  %227 = vmatprep.mubr.bf16.mxu0 0
  %228 = vmatmul.mubr.bf16.gmra.mrb[0].mxu0 %v124
  %v229 = vpop.f32.mrb[0].mxu0
  %v230 = vadd.f32 0.0, %v229
  %v231 = vpop.f32.mrb[0].mxu0
  %v232 = vpop.f32.mrb[0].mxu0
  %v233 = vadd.f32 0.0, %v232
  %v234 = vpop.f32.mrb[0].mxu0
  %235 = vmatprep.mubr.bf16.mxu0 0
  %236 = vmatmul.mubr.bf16.gmra.mrb[0].mxu0 %v125
  %v237 = vpop.f32.mrb[0].mxu0
  %v238 = vadd.f32 0.0, %v237
  %v239 = vpop.f32.mrb[0].mxu0
  %v240 = vpop.f32.mrb[0].mxu0
  %v241 = vadd.f32 0.0, %v240
  %v242 = vpop.f32.mrb[0].mxu0
  %243 = vmatprep.mubr.bf16.mxu0 0
  %244 = vmatmul.mubr.bf16.gmra.mrb[0].mxu0 %v126
  %v245 = vpop.f32.mrb[0].mxu0
  %v246 = vadd.f32 0.0, %v245
  %v247 = vpop.f32.mrb[0].mxu0
  %v248 = vpop.f32.mrb[0].mxu0
  %v249 = vadd.f32 0.0, %v248
  %v250 = vpop.f32.mrb[0].mxu0
  %251 = vmatprep.mubr.bf16.mxu0 0
  %252 = vmatmul.mubr.bf16.gmra.mrb[0].mxu0 %v127
  %v253 = vpop.f32.mrb[0].mxu0
  %v254 = vadd.f32 0.0, %v253
  %v255 = vpop.f32.mrb[0].mxu0
  %v256 = vpop.f32.mrb[0].mxu0
  %v257 = vadd.f32 0.0, %v256
  %v258 = vpop.f32.mrb[0].mxu0
  %259 = vmatprep.mubr.bf16.mxu0 0
  %260 = vmatmul.mubr.bf16.gmra.mrb[0].mxu0 %v128
  %v261 = vpop.f32.mrb[0].mxu0
  %v262 = vadd.f32 0.0, %v261
  %v263 = vpop.f32.mrb[0].mxu0
  %v264 = vpop.f32.mrb[0].mxu0
  %v265 = vadd.f32 0.0, %v264
  %v266 = vpop.f32.mrb[0].mxu0
  %267 = vmatprep.mubr.bf16.mxu0 0
  %268 = vmatmul.mubr.bf16.gmra.mrb[0].mxu0 %v129
  %v269 = vpop.f32.mrb[0].mxu0
  %v270 = vadd.f32 0.0, %v269
  %v271 = vpop.f32.mrb[0].mxu0
  %v272 = vpop.f32.mrb[0].mxu0
  %v273 = vadd.f32 0.0, %v272
  %v274 = vpop.f32.mrb[0].mxu0
  %275 = vmatprep.mubr.bf16.mxu0 0
  %276 = vmatmul.mubr.bf16.gmra.mrb[0].mxu0 %v130
  %v277 = vpop.f32.mrb[0].mxu0
  %v278 = vadd.f32 0.0, %v277
  %v279 = vpop.f32.mrb[0].mxu0
  %v280 = vpop.f32.mrb[0].mxu0
  %v281 = vadd.f32 0.0, %v280
  %v282 = vpop.f32.mrb[0].mxu0
  %283 = vdwg.mxu0
  %v284 = vadd.f32 %v59, %v222
  %v285 = vadd.f32 %v60, %v225
  %v286 = vadd.f32 %v61, %v230
  %v287 = vadd.f32 %v62, %v233
  %v288 = vadd.f32 %v63, %v238
  %v289 = vadd.f32 %v64, %v241
  %v290 = vadd.f32 %v65, %v246
  %v291 = vadd.f32 %v66, %v249
  %v292 = vadd.f32 %v67, %v254
  %v293 = vadd.f32 %v68, %v257
  %v294 = vadd.f32 %v69, %v262
  %v295 = vadd.f32 %v70, %v265
  %v296 = vadd.f32 %v71, %v270
  %v297 = vadd.f32 %v72, %v273
  %v298 = vadd.f32 %v73, %v278
  %v299 = vadd.f32 %v74, %v281
  %300 = vst [vmem:[#allocation2] sm:$0xff] %v284
  %301 = vst [vmem:[#allocation2 + $0x8] sm:$0xff] %v285
  %302 = vst [vmem:[#allocation2 + $0x10] sm:$0xff] %v286
  %303 = vst [vmem:[#allocation2 + $0x18] sm:$0xff] %v287
  %304 = vst [vmem:[#allocation2 + $0x20] sm:$0xff] %v288
  %305 = vst [vmem:[#allocation2 + $0x28] sm:$0xff] %v289
  %306 = vst [vmem:[#allocation2 + $0x30] sm:$0xff] %v290
  %307 = vst [vmem:[#allocation2 + $0x38] sm:$0xff] %v291
  %308 = vst [vmem:[#allocation2 + $0x40] sm:$0xff] %v292
  %309 = vst [vmem:[#allocation2 + $0x48] sm:$0xff] %v293
  %310 = vst [vmem:[#allocation2 + $0x50] sm:$0xff] %v294
  %311 = vst [vmem:[#allocation2 + $0x58] sm:$0xff] %v295
  %312 = vst [vmem:[#allocation2 + $0x60] sm:$0xff] %v296
  %313 = vst [vmem:[#allocation2 + $0x68] sm:$0xff] %v297
  %314 = vst [vmem:[#allocation2 + $0x70] sm:$0xff] %v298
  %315 = vst [vmem:[#allocation2 + $0x78] sm:$0xff] %v299
  // Predicated region
  $region22: #{gcn3_forward_padded.5} parent=0 // pred_check
    %p316 = pneg %p18
  $region23: #{gcn3_forward_padded.5} parent=0 // pred_check_branch
    %318 = sbr.rel (%p316) target = $region25
  $region24: #{gcn3_forward_padded.5} parent=0 // pred_region
    %v319 = vld [vmem:[#allocation2] sm:$0xff]
    %v320 = vld [vmem:[#allocation2 + $0x8] sm:$0xff]
    %v321 = vld [vmem:[#allocation2 + $0x10] sm:$0xff]
    %v322 = vld [vmem:[#allocation2 + $0x18] sm:$0xff]
    %v323 = vld [vmem:[#allocation2 + $0x20] sm:$0xff]
    %v324 = vld [vmem:[#allocation2 + $0x28] sm:$0xff]
    %v325 = vld [vmem:[#allocation2 + $0x30] sm:$0xff]
    %v326 = vld [vmem:[#allocation2 + $0x38] sm:$0xff]
    %v327 = vld [vmem:[#allocation2 + $0x40] sm:$0xff]
    %v328 = vld [vmem:[#allocation2 + $0x48] sm:$0xff]
    %v329 = vld [vmem:[#allocation2 + $0x50] sm:$0xff]
    %v330 = vld [vmem:[#allocation2 + $0x58] sm:$0xff]
    %v331 = vld [vmem:[#allocation2 + $0x60] sm:$0xff]
    %v332 = vld [vmem:[#allocation2 + $0x68] sm:$0xff]
    %v333 = vld [vmem:[#allocation2 + $0x70] sm:$0xff]
    %v334 = vld [vmem:[#allocation2 + $0x78] sm:$0xff]
    %v335 = vld [vmem:[%s2] sm:$0x1]
    %v337 = vlaneseq
    %v338 = vshrl.u32 %v337, 7
    %v339 = vsub.s32 0, %v338
    %v340 = vrot.slane %v335, %v339
    %v342 = vadd.f32 %v319, %v340
    %v343 = vadd.f32 %v320, %v340
    %v344 = vadd.f32 %v321, %v340
    %v345 = vadd.f32 %v322, %v340
    %v346 = vadd.f32 %v323, %v340
    %v347 = vadd.f32 %v324, %v340
    %v348 = vadd.f32 %v325, %v340
    %v349 = vadd.f32 %v326, %v340
    %v350 = vadd.f32 %v327, %v340
    %v351 = vadd.f32 %v328, %v340
    %v352 = vadd.f32 %v329, %v340
    %v353 = vadd.f32 %v330, %v340
    %v354 = vadd.f32 %v331, %v340
    %v355 = vadd.f32 %v332, %v340
    %v356 = vadd.f32 %v333, %v340
    %v357 = vadd.f32 %v334, %v340
    %vm358 = vcmp.ge.f32.partialorder %v342, 0.0
    %vm359 = vcmp.ge.f32.partialorder %v343, 0.0
    %vm360 = vcmp.ge.f32.partialorder %v344, 0.0
    %vm361 = vcmp.ge.f32.partialorder %v345, 0.0
    %vm362 = vcmp.ge.f32.partialorder %v346, 0.0
    %vm363 = vcmp.ge.f32.partialorder %v347, 0.0
    %vm364 = vcmp.ge.f32.partialorder %v348, 0.0
    %vm365 = vcmp.ge.f32.partialorder %v349, 0.0
    %vm366 = vcmp.ge.f32.partialorder %v350, 0.0
    %vm367 = vcmp.ge.f32.partialorder %v351, 0.0
    %vm368 = vcmp.ge.f32.partialorder %v352, 0.0
    %vm369 = vcmp.ge.f32.partialorder %v353, 0.0
    %vm370 = vcmp.ge.f32.partialorder %v354, 0.0
    %vm371 = vcmp.ge.f32.partialorder %v355, 0.0
    %vm372 = vcmp.ge.f32.partialorder %v356, 0.0
    %vm373 = vcmp.ge.f32.partialorder %v357, 0.0
    %v374 = vmul.f32 %v342, 0.01
    %v375 = vmul.f32 %v343, 0.01
    %v376 = vmul.f32 %v344, 0.01
    %v377 = vmul.f32 %v345, 0.01
    %v378 = vmul.f32 %v346, 0.01
    %v379 = vmul.f32 %v347, 0.01
    %v380 = vmul.f32 %v348, 0.01
    %v381 = vmul.f32 %v349, 0.01
    %v382 = vmul.f32 %v350, 0.01
    %v383 = vmul.f32 %v351, 0.01
    %v384 = vmul.f32 %v352, 0.01
    %v385 = vmul.f32 %v353, 0.01
    %v386 = vmul.f32 %v354, 0.01
    %v387 = vmul.f32 %v355, 0.01
    %v388 = vmul.f32 %v356, 0.01
    %v389 = vmul.f32 %v357, 0.01
    %v390 = vsel %vm358, %v342, %v374
    %v391 = vsel %vm359, %v343, %v375
    %v392 = vsel %vm360, %v344, %v376
    %v393 = vsel %vm361, %v345, %v377
    %v394 = vsel %vm362, %v346, %v378
    %v395 = vsel %vm363, %v347, %v379
    %v396 = vsel %vm364, %v348, %v380
    %v397 = vsel %vm365, %v349, %v381
    %v398 = vsel %vm366, %v350, %v382
    %v399 = vsel %vm367, %v351, %v383
    %v400 = vsel %vm368, %v352, %v384
    %v401 = vsel %vm369, %v353, %v385
    %v402 = vsel %vm370, %v354, %v386
    %v403 = vsel %vm371, %v355, %v387
    %v404 = vsel %vm372, %v356, %v388
    %v405 = vsel %vm373, %v357, %v389
    %v406 = vpack.c.bf16 %v391, %v390
    %v407 = vpack.c.bf16 %v393, %v392
    %v408 = vpack.c.bf16 %v395, %v394
    %v409 = vpack.c.bf16 %v397, %v396
    %v410 = vpack.c.bf16 %v399, %v398
    %v411 = vpack.c.bf16 %v401, %v400
    %v412 = vpack.c.bf16 %v403, %v402
    %v413 = vpack.c.bf16 %v405, %v404
    %v414 = vld [vmem:[%s3] sm:$0xf]
    %v415 = vld [vmem:[%s3 + $0x4] sm:$0xf]
    %v416 = vld [vmem:[%s3 + $0x8] sm:$0xf]
    %v417 = vld [vmem:[%s3 + $0xc] sm:$0xf]
    %v418 = vld [vmem:[%s3 + $0x10] sm:$0xf]
    %v419 = vld [vmem:[%s3 + $0x14] sm:$0xf]
    %v420 = vld [vmem:[%s3 + $0x18] sm:$0xf]
    %v421 = vld [vmem:[%s3 + $0x1c] sm:$0xf]
    %v422 = vld [vmem:[%s3 + $0x20] sm:$0xf]
    %v423 = vld [vmem:[%s3 + $0x24] sm:$0xf]
    %v424 = vld [vmem:[%s3 + $0x28] sm:$0xf]
    %v425 = vld [vmem:[%s3 + $0x2c] sm:$0xf]
    %v426 = vld [vmem:[%s3 + $0x30] sm:$0xf]
    %v427 = vld [vmem:[%s3 + $0x34] sm:$0xf]
    %v428 = vld [vmem:[%s3 + $0x38] sm:$0xf]
    %v429 = vld [vmem:[%s3 + $0x3c] sm:$0xf]
    %v446 = vunpack.c.l.b16 %v414
    %v447 = vunpack.c.l.b16 %v415
    %v448 = vunpack.c.l.b16 %v416
    %v449 = vunpack.c.l.b16 %v417
    %v450 = vunpack.c.l.b16 %v418
    %v451 = vunpack.c.l.b16 %v419
    %v452 = vunpack.c.l.b16 %v420
    %v453 = vunpack.c.l.b16 %v421
    %v454 = vunpack.c.l.b16 %v422
    %v455 = vunpack.c.l.b16 %v423
    %v456 = vunpack.c.l.b16 %v424
    %v457 = vunpack.c.l.b16 %v425
    %v458 = vunpack.c.l.b16 %v426
    %v459 = vunpack.c.l.b16 %v427
    %v460 = vunpack.c.l.b16 %v428
    %v461 = vunpack.c.l.b16 %v429
    %v462 = vpack.c.b16 %v447, %v446
    %v463 = vpack.c.b16 %v449, %v448
    %v464 = vpack.c.b16 %v451, %v450
    %v465 = vpack.c.b16 %v453, %v452
    %v466 = vpack.c.b16 %v455, %v454
    %v467 = vpack.c.b16 %v457, %v456
    %v468 = vpack.c.b16 %v459, %v458
    %v469 = vpack.c.b16 %v461, %v460
    %478 = vmatprep.subr.bf16.mxu0 0
    %479 = vmatpush1.bf16.msra.mxu0 %v462
    %480 = vmatprep.subr.bf16.mxu0 0
    %481 = vmatpush1.bf16.msra.mxu0 %v463
    %482 = vmatprep.subr.bf16.mxu0 0
    %483 = vmatpush1.bf16.msra.mxu0 %v464
    %484 = vmatprep.subr.bf16.mxu0 0
    %485 = vmatpush1.bf16.msra.mxu0 %v465
    %486 = vmatprep.subr.bf16.mxu0 0
    %487 = vmatpush1.bf16.msra.mxu0 %v466
    %488 = vmatprep.subr.bf16.mxu0 0
    %489 = vmatpush1.bf16.msra.mxu0 %v467
    %490 = vmatprep.subr.bf16.mxu0 0
    %491 = vmatpush1.bf16.msra.mxu0 %v468
    %492 = vmatprep.subr.bf16.mxu0 0
    %493 = vmatpush1.bf16.msra.mxu0 %v469
    %494 = vmatprep.subr.bf16.mxu0 0
    %495 = vmatpush1.bf16.msra.mxu0 0
    %496 = vmatprep.subr.bf16.mxu0 0
    %497 = vmatpush1.bf16.msra.mxu0 0
    %498 = vmatprep.subr.bf16.mxu0 0
    %499 = vmatpush1.bf16.msra.mxu0 0
    %500 = vmatprep.subr.bf16.mxu0 0
    %501 = vmatpush1.bf16.msra.mxu0 0
    %502 = vmatprep.subr.bf16.mxu0 0
    %503 = vmatpush1.bf16.msra.mxu0 0
    %504 = vmatprep.subr.bf16.mxu0 0
    %505 = vmatpush1.bf16.msra.mxu0 0
    %506 = vmatprep.subr.bf16.mxu0 0
    %507 = vmatpush1.bf16.msra.mxu0 0
    %508 = vmatprep.subr.bf16.mxu0 0
    %509 = vmatpush1.bf16.msra.mxu0 0
    %510 = vmatprep.mubr.bf16.mxu0 0
    %511 = vmatmul.mubr.bf16.gmra.mrb[0].mxu0 %v406
    %v512 = vpop.f32.mrb[0].mxu0
    %v513 = vadd.f32 0.0, %v512
    %v514 = vpop.f32.mrb[0].mxu0
    %v515 = vpop.f32.mrb[0].mxu0
    %v516 = vadd.f32 0.0, %v515
    %v517 = vpop.f32.mrb[0].mxu0
    %518 = vmatprep.mubr.bf16.mxu0 0
    %519 = vmatmul.mubr.bf16.gmra.mrb[0].mxu0 %v407
    %v520 = vpop.f32.mrb[0].mxu0
    %v521 = vadd.f32 0.0, %v520
    %v522 = vpop.f32.mrb[0].mxu0
    %v523 = vpop.f32.mrb[0].mxu0
    %v524 = vadd.f32 0.0, %v523
    %v525 = vpop.f32.mrb[0].mxu0
    %526 = vmatprep.mubr.bf16.mxu0 0
    %527 = vmatmul.mubr.bf16.gmra.mrb[0].mxu0 %v408
    %v528 = vpop.f32.mrb[0].mxu0
    %v529 = vadd.f32 0.0, %v528
    %v530 = vpop.f32.mrb[0].mxu0
    %v531 = vpop.f32.mrb[0].mxu0
    %v532 = vadd.f32 0.0, %v531
    %v533 = vpop.f32.mrb[0].mxu0
    %534 = vmatprep.mubr.bf16.mxu0 0
    %535 = vmatmul.mubr.bf16.gmra.mrb[0].mxu0 %v409
    %v536 = vpop.f32.mrb[0].mxu0
    %v537 = vadd.f32 0.0, %v536
    %v538 = vpop.f32.mrb[0].mxu0
    %v539 = vpop.f32.mrb[0].mxu0
    %v540 = vadd.f32 0.0, %v539
    %v541 = vpop.f32.mrb[0].mxu0
    %542 = vmatprep.mubr.bf16.mxu0 0
    %543 = vmatmul.mubr.bf16.gmra.mrb[0].mxu0 %v410
    %v544 = vpop.f32.mrb[0].mxu0
    %v545 = vadd.f32 0.0, %v544
    %v546 = vpop.f32.mrb[0].mxu0
    %v547 = vpop.f32.mrb[0].mxu0
    %v548 = vadd.f32 0.0, %v547
    %v549 = vpop.f32.mrb[0].mxu0
    %550 = vmatprep.mubr.bf16.mxu0 0
    %551 = vmatmul.mubr.bf16.gmra.mrb[0].mxu0 %v411
    %v552 = vpop.f32.mrb[0].mxu0
    %v553 = vadd.f32 0.0, %v552
    %v554 = vpop.f32.mrb[0].mxu0
    %v555 = vpop.f32.mrb[0].mxu0
    %v556 = vadd.f32 0.0, %v555
    %v557 = vpop.f32.mrb[0].mxu0
    %558 = vmatprep.mubr.bf16.mxu0 0
    %559 = vmatmul.mubr.bf16.gmra.mrb[0].mxu0 %v412
    %v560 = vpop.f32.mrb[0].mxu0
    %v561 = vadd.f32 0.0, %v560
    %v562 = vpop.f32.mrb[0].mxu0
    %v563 = vpop.f32.mrb[0].mxu0
    %v564 = vadd.f32 0.0, %v563
    %v565 = vpop.f32.mrb[0].mxu0
    %566 = vmatprep.mubr.bf16.mxu0 0
    %567 = vmatmul.mubr.bf16.gmra.mrb[0].mxu0 %v413
    %v568 = vpop.f32.mrb[0].mxu0
    %v569 = vadd.f32 0.0, %v568
    %v570 = vpop.f32.mrb[0].mxu0
    %v571 = vpop.f32.mrb[0].mxu0
    %v572 = vadd.f32 0.0, %v571
    %v573 = vpop.f32.mrb[0].mxu0
    %574 = vdwg.mxu0
    %v575 = vpack.c.bf16 %v516, %v513
    %v576 = vpack.c.bf16 %v524, %v521
    %v577 = vpack.c.bf16 %v532, %v529
    %v578 = vpack.c.bf16 %v540, %v537
    %v579 = vpack.c.bf16 %v548, %v545
    %v580 = vpack.c.bf16 %v556, %v553
    %v581 = vpack.c.bf16 %v564, %v561
    %v582 = vpack.c.bf16 %v572, %v569
    %v591 = vunpack.c.l.b16 %v575
    %v592 = vunpack.c.h.b16 %v575
    %v593 = vunpack.c.l.b16 %v576
    %v594 = vunpack.c.h.b16 %v576
    %v595 = vunpack.c.l.b16 %v577
    %v596 = vunpack.c.h.b16 %v577
    %v597 = vunpack.c.l.b16 %v578
    %v598 = vunpack.c.h.b16 %v578
    %v599 = vunpack.c.l.b16 %v579
    %v600 = vunpack.c.h.b16 %v579
    %v601 = vunpack.c.l.b16 %v580
    %v602 = vunpack.c.h.b16 %v580
    %v603 = vunpack.c.l.b16 %v581
    %v604 = vunpack.c.h.b16 %v581
    %v605 = vunpack.c.l.b16 %v582
    %v606 = vunpack.c.h.b16 %v582
    %v607 = vpack.c.b16 %v591, %v591
    %v608 = vpack.c.b16 %v592, %v592
    %v609 = vpack.c.b16 %v593, %v593
    %v610 = vpack.c.b16 %v594, %v594
    %v611 = vpack.c.b16 %v595, %v595
    %v612 = vpack.c.b16 %v596, %v596
    %v613 = vpack.c.b16 %v597, %v597
    %v614 = vpack.c.b16 %v598, %v598
    %v615 = vpack.c.b16 %v599, %v599
    %v616 = vpack.c.b16 %v600, %v600
    %v617 = vpack.c.b16 %v601, %v601
    %v618 = vpack.c.b16 %v602, %v602
    %v619 = vpack.c.b16 %v603, %v603
    %v620 = vpack.c.b16 %v604, %v604
    %v621 = vpack.c.b16 %v605, %v605
    %v622 = vpack.c.b16 %v606, %v606
    %639 = vst [vmem:[%s4] sm:$0xf] %v607
    %640 = vst [vmem:[%s4 + $0x4] sm:$0xf] %v608
    %641 = vst [vmem:[%s4 + $0x8] sm:$0xf] %v609
    %642 = vst [vmem:[%s4 + $0xc] sm:$0xf] %v610
    %643 = vst [vmem:[%s4 + $0x10] sm:$0xf] %v611
    %644 = vst [vmem:[%s4 + $0x14] sm:$0xf] %v612
    %645 = vst [vmem:[%s4 + $0x18] sm:$0xf] %v613
    %646 = vst [vmem:[%s4 + $0x1c] sm:$0xf] %v614
    %647 = vst [vmem:[%s4 + $0x20] sm:$0xf] %v615
    %648 = vst [vmem:[%s4 + $0x24] sm:$0xf] %v616
    %649 = vst [vmem:[%s4 + $0x28] sm:$0xf] %v617
    %650 = vst [vmem:[%s4 + $0x2c] sm:$0xf] %v618
    %651 = vst [vmem:[%s4 + $0x30] sm:$0xf] %v619
    %652 = vst [vmem:[%s4 + $0x34] sm:$0xf] %v620
    %653 = vst [vmem:[%s4 + $0x38] sm:$0xf] %v621
    %654 = vst [vmem:[%s4 + $0x3c] sm:$0xf] %v622
  $region25: #{gcn3_forward_padded.5} parent=0 // pred_fallthru
    _
  // Predicated region
  $region26: #{gcn3_forward_padded.5} parent=0 // pred_check
    _
  $region27: #{gcn3_forward_padded.5} parent=0 // pred_check_branch
    %656 = sbr.rel (0) target = $region29
  $region28: #{gcn3_forward_padded.5} parent=0 // pred_region
    _
  $region29: #{gcn3_forward_padded.5} parent=0 // pred_fallthru
    _
  // Predicated region
  $region30: #{gcn3_forward_padded.5} parent=0 // pred_check
    _
  $region31: #{gcn3_forward_padded.5} parent=0 // pred_check_branch
    %658 = sbr.rel (0) target = $region33
  $region32: #{gcn3_forward_padded.5} parent=0 // pred_region
    _
  $region33: #{gcn3_forward_padded.5} parent=0 // pred_fallthru
    _

</llo_original>
